<compile_context>
chip_gen: v7x
topology: tpu7x:2x2x1
jax: 0.10.0
libtpu: 0.0.40
codegen_flags: <defaults>
</compile_context>

<pallas_src>
import functools

import jax
import jax.numpy as jnp
from jax.experimental import pallas as pl
from jax.experimental.pallas import tpu as pltpu

# Hidden sizes hard-coded in the PyTorch module.
N1 = 500
N2 = 500
N3 = 500
H_PAD = 512  # 500 zero-padded to the next multiple of 128 (lane / MXU aligned)


def _round_up(x, m):
    return (x + m - 1) // m * m


def _default_bf16_epilogue():
    """bf16 bias/ReLU epilogues only on parts with a bf16 VPU (v6e / v7x)."""
    try:
        kind = jax.devices()[0].device_kind.lower()
    except Exception:
        return False
    return ("v6" in kind) or ("v7" in kind) or ("7x" in kind)


def mlp_kernel(x_ref, z_ref, w1x_ref, w1z_ref, b1_ref, w2_ref, b2_ref,
               w3_ref, b3_ref, w4_ref, b4_ref, o_ref, *, bf16_epilogue):
    f32 = jnp.float32
    bf16 = jnp.bfloat16
    ep_dtype = bf16 if bf16_epilogue else f32

    def epilogue(acc_f32, b_ref):
        # bias add + ReLU; bf16 on v6e/v7x (halves VALU work), f32 on v5e.
        h = acc_f32.astype(ep_dtype) + b_ref[...].astype(ep_dtype)
        return jnp.maximum(h, 0)

    # Layer 1: tiny contraction, W1 row-split so no concat is needed:
    #   h1 = x @ W1[:dx] + z @ W1[dx:] + b1.  bf16 MXU operands, f32 accum.
    acc = jnp.dot(x_ref[...].astype(bf16), w1x_ref[...],
                  preferred_element_type=f32)
    acc = acc + jnp.dot(z_ref[...].astype(bf16), w1z_ref[...],
                        preferred_element_type=f32)
    h = epilogue(acc, b1_ref)

    # Layer 2: bf16 MXU operands, f32 accumulation.
    acc = jnp.dot(h.astype(bf16), w2_ref[...], preferred_element_type=f32)
    h = epilogue(acc, b2_ref)

    # Layer 3: bf16 MXU operands, f32 accumulation.
    acc = jnp.dot(h.astype(bf16), w3_ref[...], preferred_element_type=f32)
    h = epilogue(acc, b3_ref)

    # Layer 4 (output width 1): VPU multiply + XLU lane-reduce against the
    # (1, 512) weight row -- avoids a 1-useful-column MXU pass.
    y = jnp.sum(h.astype(f32) * w4_ref[...], axis=-1, keepdims=True) + b4_ref[...]

    # 0.5 * sigmoid (EUP exp + VPU), stored f32.
    o_ref[...] = 0.5 * jax.nn.sigmoid(y)


def prepare_params(params, d_inputs):
    """Split W1 by input source (x rows / z rows), zero-pad hidden dims
    500 -> 512, store MXU weight operands in bf16, and transpose the final
    (500, 1) weight into a lane-dense (1, 512) f32 row for the in-kernel
    VPU reduce.  Padded lanes stay exactly 0 through bias/ReLU."""
    w1, b1, w2, b2, w3, b3, w4, b4 = params
    pc1 = H_PAD - w1.shape[1]
    w1p = jnp.pad(w1, ((0, 0), (0, pc1)))
    w1x = w1p[:d_inputs].astype(jnp.bfloat16)                            # (dx, 512)
    w1z = w1p[d_inputs:].astype(jnp.bfloat16)                            # (dz, 512)
    b1p = jnp.pad(b1, ((0, 0), (0, pc1))).astype(jnp.float32)            # (1, 512)
    w2p = jnp.pad(w2, ((0, H_PAD - w2.shape[0]),
                       (0, H_PAD - w2.shape[1]))).astype(jnp.bfloat16)   # (512, 512)
    b2p = jnp.pad(b2, ((0, 0), (0, H_PAD - b2.shape[1]))).astype(jnp.float32)
    w3p = jnp.pad(w3, ((0, H_PAD - w3.shape[0]),
                       (0, H_PAD - w3.shape[1]))).astype(jnp.bfloat16)   # (512, 512)
    b3p = jnp.pad(b3, ((0, 0), (0, H_PAD - b3.shape[1]))).astype(jnp.float32)
    w4p = jnp.pad(w4, ((0, H_PAD - w4.shape[0]), (0, 0)))                # (512, 1)
    w4row = jnp.transpose(w4p).astype(jnp.float32)                       # (1, 512)
    b4p = b4.astype(jnp.float32)                                         # (1, 1)
    return (w1x, w1z, b1p, w2p, b2p, w3p, b3p, w4row, b4p)


def demo_network_forward(x, z, prepared_params, *, tile_b=2048,
                         bf16_epilogue=None):
    """x: (B, d_inputs) f32, z: (B, d_demo) f32 -> (B,) f32."""
    if bf16_epilogue is None:
        bf16_epilogue = _default_bf16_epilogue()

    x = x.astype(jnp.float32)
    z = z.astype(jnp.float32)
    B, dx = x.shape
    dz = z.shape[1]

    # Batch tiling: as large as the cap allows (amortizes the ~0.35us per-step
    # overhead), but always >= 2 tiles when B > 8 so both v7x TensorCores get
    # work; tile is balanced (~ceil(B/num_tiles)) and a multiple of 8 sublanes.
    cap = max(8, _round_up(tile_b, 8))
    if B <= 8:
        tb = 8
    else:
        n = max(2, -(-B // cap))
        tb = _round_up(-(-B // n), 8)
    B_pad = _round_up(B, tb)
    if B_pad != B:
        x = jnp.pad(x, ((0, B_pad - B), (0, 0)))
        z = jnp.pad(z, ((0, B_pad - B), (0, 0)))
    num_tiles = B_pad // tb

    w1x, w1z, b1, w2, b2, w3, b3, w4row, b4 = prepared_params

    # Advisory cost hint so XLA schedules the surrounding glue sensibly.
    flops = 2 * B_pad * ((dx + dz) * H_PAD + 2 * H_PAD * H_PAD + H_PAD)
    bytes_accessed = ((b1.size + b2.size + b3.size + w4row.size + b4.size) * 4
                      + (w1x.size + w1z.size + w2.size + w3.size) * 2
                      + B_pad * (dx + dz + 1) * 4)
    cost = pl.CostEstimate(flops=int(flops), transcendentals=int(B_pad),
                           bytes_accessed=int(bytes_accessed))

    # Weights/biases: constant block index -> DMA'd once, resident in VMEM.
    full = lambda shape: pl.BlockSpec(shape, lambda i: (0, 0))

    kernel = functools.partial(mlp_kernel, bf16_epilogue=bf16_epilogue)

    out = pl.pallas_call(
        kernel,
        out_shape=jax.ShapeDtypeStruct((B_pad, 1), jnp.float32),
        grid_spec=pltpu.PrefetchScalarGridSpec(
            num_scalar_prefetch=0,
            grid=(num_tiles,),
            in_specs=[
                pl.BlockSpec((tb, dx), lambda i: (i, 0)),   # x tile
                pl.BlockSpec((tb, dz), lambda i: (i, 0)),   # z tile
                full(w1x.shape), full(w1z.shape), full(b1.shape),
                full(w2.shape), full(b2.shape),
                full(w3.shape), full(b3.shape),
                full(w4row.shape), full(b4.shape),
            ],
            out_specs=pl.BlockSpec((tb, 1), lambda i: (i, 0)),
        ),
        compiler_params=pltpu.CompilerParams(
            dimension_semantics=("parallel",),
            vmem_limit_bytes=40 * 1024 * 1024,
        ),
        cost_estimate=cost,
    )(x, z, w1x, w1z, b1, w2, b2, w3, b3, w4row, b4)

    # Drop batch padding; torch.squeeze on (B, 1) -> (B,).
    return jnp.squeeze(out[:B], axis=-1)


def init_params(key, in_features):
    """Deterministic init mirroring torch.nn.Linear (U(-1/sqrt(fan_in), ...)).
    Weights stored (in, out) so the forward does x @ W + b."""
    sizes = [(in_features, N1), (N1, N2), (N2, N3), (N3, 1)]
    params = []
    for i, (fin, fout) in enumerate(sizes):
        kw, kb = jax.random.split(jax.random.fold_in(key, i))
        bound = 1.0 / jnp.sqrt(jnp.float32(fin))
        w = jax.random.uniform(kw, (fin, fout), jnp.float32, -bound, bound)
        b = jax.random.uniform(kb, (1, fout), jnp.float32, -bound, bound)
        params += [w, b]
    return tuple(params)


def reference_forward_f32(x, z, params):
    """Pure f32, unpadded reference (matches the PyTorch module's math)."""
    w1, b1, w2, b2, w3, b3, w4, b4 = params
    h = jnp.concatenate([x, z], axis=1)
    h = jnp.maximum(h @ w1 + b1, 0.0)
    h = jnp.maximum(h @ w2 + b2, 0.0)
    h = jnp.maximum(h @ w3 + b3, 0.0)
    y = h @ w4 + b4
    return jnp.squeeze(0.5 * jax.nn.sigmoid(y), axis=-1)


def reference_forward_prepared(x, z, prepared, *, bf16_epilogue):
    """Reference mirroring the kernel's numerics (512-pad, bf16 MXU operands,
    optional bf16 epilogues, split W1, VPU final reduce)."""
    w1x, w1z, b1, w2, b2, w3, b3, w4row, b4 = prepared
    f32, bf16 = jnp.float32, jnp.bfloat16
    ep = bf16 if bf16_epilogue else f32

    def epi(acc, b):
        return jnp.maximum(acc.astype(ep) + b.astype(ep), 0)

    x = x.astype(f32)
    z = z.astype(f32)
    acc = (jnp.dot(x.astype(bf16), w1x, preferred_element_type=f32)
           + jnp.dot(z.astype(bf16), w1z, preferred_element_type=f32))
    h = epi(acc, b1)
    acc = jnp.dot(h.astype(bf16), w2, preferred_element_type=f32)
    h = epi(acc, b2)
    acc = jnp.dot(h.astype(bf16), w3, preferred_element_type=f32)
    h = epi(acc, b3)
    y = jnp.sum(h.astype(f32) * w4row, axis=-1, keepdims=True) + b4
    return jnp.squeeze(0.5 * jax.nn.sigmoid(y), axis=-1)


if __name__ == "__main__":
    key = jax.random.PRNGKey(0)
    kx, kz, kp, kx2, kz2 = jax.random.split(key, 5)

    d_inputs = 2        # ['score1', 'choice1']
    d_demo = 6          # demographics columns (synthetic)
    # TODO(synk): the pandas CSV loading / torch device plumbing around the
    # module is data prep, not part of the forward pass, and is not translated.

    params = init_params(kp, d_inputs + d_demo)
    prepared = prepare_params(params, d_inputs)
    bf16_ep = _default_bf16_epilogue()

    # Small single-tile batch.
    batch = 8
    x = jax.random.normal(kx, (batch, d_inputs), jnp.float32)
    z = jax.random.normal(kz, (batch, d_demo), jnp.float32)
    out = jax.block_until_ready(demo_network_forward(x, z, prepared))
    assert out.shape == (batch,)

    # Exact-semantics check against a reference with identical numerics.
    ref_same = reference_forward_prepared(x, z, prepared, bf16_epilogue=bf16_ep)
    assert jnp.allclose(out, ref_same, atol=5e-3, rtol=5e-3)

    # Sanity check against the pure-f32 PyTorch-equivalent math
    # (loose tolerance due to bf16 MXU operands).
    ref_f32 = reference_forward_f32(x, z, params)
    assert jnp.allclose(out, ref_f32, atol=2e-2, rtol=0.0)

    # Multi-tile batch: exercises batch padding and the >=2 "parallel" grid
    # steps that keep both v7x TensorCores busy.
    batch2 = 40
    x2 = jax.random.normal(kx2, (batch2, d_inputs), jnp.float32)
    z2 = jax.random.normal(kz2, (batch2, d_demo), jnp.float32)
    out2 = jax.block_until_ready(demo_network_forward(x2, z2, prepared))
    assert out2.shape == (batch2,)
    ref2 = reference_forward_prepared(x2, z2, prepared, bf16_epilogue=bf16_ep)
    assert jnp.allclose(out2, ref2, atol=5e-3, rtol=5e-3)

    print("KERNEL_OK")
</pallas_src>

<mosaic_0001>
module attributes {stable_mosaic.version = 11 : i64} {
  func.func @mlp_kernel(%arg0: i32, %arg1: memref<8x2xf32, #tpu.memory_space<vmem>>, %arg2: memref<8x6xf32, #tpu.memory_space<vmem>>, %arg3: memref<2x512xbf16, #tpu.memory_space<vmem>>, %arg4: memref<6x512xbf16, #tpu.memory_space<vmem>>, %arg5: memref<1x512xf32, #tpu.memory_space<vmem>>, %arg6: memref<512x512xbf16, #tpu.memory_space<vmem>>, %arg7: memref<1x512xf32, #tpu.memory_space<vmem>>, %arg8: memref<512x512xbf16, #tpu.memory_space<vmem>>, %arg9: memref<1x512xf32, #tpu.memory_space<vmem>>, %arg10: memref<1x512xf32, #tpu.memory_space<vmem>>, %arg11: memref<1x1xf32, #tpu.memory_space<vmem>>, %arg12: memref<8x1xf32, #tpu.memory_space<vmem>>) attributes {dimension_semantics = [#tpu.dimension_semantics<parallel>], iteration_bounds = array<i64: 1>, scalar_prefetch = 0 : i64, scratch_operands = 0 : i64, tpu.core_type = #tpu.core_type<tc>, window_params = [{transform_indices = @transform_0, window_bounds = array<i64: 8, 2>}, {transform_indices = @transform_1, window_bounds = array<i64: 8, 6>}, {pipeline_mode = #tpu.pipeline_mode<synchronous>, transform_indices = @transform_2, window_bounds = array<i64: 2, 512>}, {pipeline_mode = #tpu.pipeline_mode<synchronous>, transform_indices = @transform_3, window_bounds = array<i64: 6, 512>}, {pipeline_mode = #tpu.pipeline_mode<synchronous>, transform_indices = @transform_4, window_bounds = array<i64: 1, 512>}, {pipeline_mode = #tpu.pipeline_mode<synchronous>, transform_indices = @transform_5, window_bounds = array<i64: 512, 512>}, {pipeline_mode = #tpu.pipeline_mode<synchronous>, transform_indices = @transform_6, window_bounds = array<i64: 1, 512>}, {pipeline_mode = #tpu.pipeline_mode<synchronous>, transform_indices = @transform_7, window_bounds = array<i64: 512, 512>}, {pipeline_mode = #tpu.pipeline_mode<synchronous>, transform_indices = @transform_8, window_bounds = array<i64: 1, 512>}, {pipeline_mode = #tpu.pipeline_mode<synchronous>, transform_indices = @transform_9, window_bounds = array<i64: 1, 512>}, {pipeline_mode = #tpu.pipeline_mode<synchronous>, transform_indices = @transform_10, window_bounds = array<i64: 1, 1>}, {transform_indices = @transform_11, window_bounds = array<i64: 8, 1>}]} {
    %c0 = arith.constant 0 : index
    %c0_0 = arith.constant 0 : index
    %0 = vector.load %arg1[%c0, %c0_0] : memref<8x2xf32, #tpu.memory_space<vmem>>, vector<8x2xf32>
    %1 = arith.truncf %0 : vector<8x2xf32> to vector<8x2xbf16>
    %c0_1 = arith.constant 0 : index
    %c0_2 = arith.constant 0 : index
    %2 = vector.load %arg3[%c0_1, %c0_2] : memref<2x512xbf16, #tpu.memory_space<vmem>>, vector<2x512xbf16>
    %cst = arith.constant dense<0.000000e+00> : vector<8x512xf32>
    %3 = tpu.matmul %1, %2, %cst {dimension_numbers = #tpu.dot_dimension_numbers<[1], [0], [0], [1], [0, 0, 1, 1], [], []>} : vector<8x2xbf16>, vector<2x512xbf16>, vector<8x512xf32> -> vector<8x512xf32>
    %c0_3 = arith.constant 0 : index
    %c0_4 = arith.constant 0 : index
    %4 = vector.load %arg2[%c0_3, %c0_4] : memref<8x6xf32, #tpu.memory_space<vmem>>, vector<8x6xf32>
    %5 = arith.truncf %4 : vector<8x6xf32> to vector<8x6xbf16>
    %c0_5 = arith.constant 0 : index
    %c0_6 = arith.constant 0 : index
    %6 = vector.load %arg4[%c0_5, %c0_6] : memref<6x512xbf16, #tpu.memory_space<vmem>>, vector<6x512xbf16>
    %cst_7 = arith.constant dense<0.000000e+00> : vector<8x512xf32>
    %7 = tpu.matmul %5, %6, %cst_7 {dimension_numbers = #tpu.dot_dimension_numbers<[1], [0], [0], [1], [0, 0, 1, 1], [], []>} : vector<8x6xbf16>, vector<6x512xbf16>, vector<8x512xf32> -> vector<8x512xf32>
    %8 = arith.addf %3, %7 : vector<8x512xf32>
    %c0_8 = arith.constant 0 : index
    %c0_9 = arith.constant 0 : index
    %9 = vector.load %arg5[%c0_8, %c0_9] : memref<1x512xf32, #tpu.memory_space<vmem>>, vector<1x512xf32>
    %10 = vector.broadcast %9 : vector<1x512xf32> to vector<8x512xf32>
    %11 = arith.addf %8, %10 : vector<8x512xf32>
    %cst_10 = arith.constant 0.000000e+00 : f32
    %12 = vector.broadcast %cst_10 : f32 to vector<8x512xf32>
    %13 = arith.maximumf %11, %12 : vector<8x512xf32>
    %14 = arith.truncf %13 : vector<8x512xf32> to vector<8x512xbf16>
    %c0_11 = arith.constant 0 : index
    %c0_12 = arith.constant 0 : index
    %15 = vector.load %arg6[%c0_11, %c0_12] : memref<512x512xbf16, #tpu.memory_space<vmem>>, vector<512x512xbf16>
    %cst_13 = arith.constant dense<0.000000e+00> : vector<8x512xf32>
    %16 = tpu.matmul %14, %15, %cst_13 {dimension_numbers = #tpu.dot_dimension_numbers<[1], [0], [0], [1], [0, 0, 1, 1], [], []>} : vector<8x512xbf16>, vector<512x512xbf16>, vector<8x512xf32> -> vector<8x512xf32>
    %c0_14 = arith.constant 0 : index
    %c0_15 = arith.constant 0 : index
    %17 = vector.load %arg7[%c0_14, %c0_15] : memref<1x512xf32, #tpu.memory_space<vmem>>, vector<1x512xf32>
    %18 = vector.broadcast %17 : vector<1x512xf32> to vector<8x512xf32>
    %19 = arith.addf %16, %18 : vector<8x512xf32>
    %cst_16 = arith.constant 0.000000e+00 : f32
    %20 = vector.broadcast %cst_16 : f32 to vector<8x512xf32>
    %21 = arith.maximumf %19, %20 : vector<8x512xf32>
    %22 = arith.truncf %21 : vector<8x512xf32> to vector<8x512xbf16>
    %c0_17 = arith.constant 0 : index
    %c0_18 = arith.constant 0 : index
    %23 = vector.load %arg8[%c0_17, %c0_18] : memref<512x512xbf16, #tpu.memory_space<vmem>>, vector<512x512xbf16>
    %cst_19 = arith.constant dense<0.000000e+00> : vector<8x512xf32>
    %24 = tpu.matmul %22, %23, %cst_19 {dimension_numbers = #tpu.dot_dimension_numbers<[1], [0], [0], [1], [0, 0, 1, 1], [], []>} : vector<8x512xbf16>, vector<512x512xbf16>, vector<8x512xf32> -> vector<8x512xf32>
    %c0_20 = arith.constant 0 : index
    %c0_21 = arith.constant 0 : index
    %25 = vector.load %arg9[%c0_20, %c0_21] : memref<1x512xf32, #tpu.memory_space<vmem>>, vector<1x512xf32>
    %26 = vector.broadcast %25 : vector<1x512xf32> to vector<8x512xf32>
    %27 = arith.addf %24, %26 : vector<8x512xf32>
    %cst_22 = arith.constant 0.000000e+00 : f32
    %28 = vector.broadcast %cst_22 : f32 to vector<8x512xf32>
    %29 = arith.maximumf %27, %28 : vector<8x512xf32>
    %c0_23 = arith.constant 0 : index
    %c0_24 = arith.constant 0 : index
    %30 = vector.load %arg10[%c0_23, %c0_24] : memref<1x512xf32, #tpu.memory_space<vmem>>, vector<1x512xf32>
    %31 = vector.broadcast %30 : vector<1x512xf32> to vector<8x512xf32>
    %32 = arith.mulf %29, %31 : vector<8x512xf32>
    %cst_25 = arith.constant dense<0.000000e+00> : vector<8xf32>
    %33 = vector.multi_reduction <add>, %32, %cst_25 [1] : vector<8x512xf32> to vector<8xf32>
    %34 = vector.shape_cast %33 : vector<8xf32> to vector<8x1xf32>
    %c0_26 = arith.constant 0 : index
    %c0_27 = arith.constant 0 : index
    %35 = vector.load %arg11[%c0_26, %c0_27] : memref<1x1xf32, #tpu.memory_space<vmem>>, vector<1x1xf32>
    %36 = vector.broadcast %35 : vector<1x1xf32> to vector<8x1xf32>
    %37 = arith.addf %34, %36 : vector<8x1xf32>
    %38 = arith.negf %37 : vector<8x1xf32>
    %39 = math.exp %38 : vector<8x1xf32>
    %cst_28 = arith.constant 1.000000e+00 : f32
    %40 = vector.broadcast %cst_28 : f32 to vector<8x1xf32>
    %41 = arith.addf %40, %39 : vector<8x1xf32>
    %42 = arith.divf %40, %41 : vector<8x1xf32>
    %cst_29 = arith.constant 5.000000e-01 : f32
    %43 = vector.broadcast %cst_29 : f32 to vector<8x1xf32>
    %44 = arith.mulf %43, %42 : vector<8x1xf32>
    %c0_30 = arith.constant 0 : index
    %c0_31 = arith.constant 0 : index
    %45 = vector.load %arg12[%c0_30, %c0_31] : memref<8x1xf32, #tpu.memory_space<vmem>>, vector<8x1xf32>
    tpu.vector_store %arg12[%c0_30, %c0_31], %44 {strides = array<i32>} : memref<8x1xf32, #tpu.memory_space<vmem>>, vector<8x1xf32>,
    return
  }
  func.func @transform_0(%arg0: i32) -> (i32, i32) {
    %c0_i32 = arith.constant 0 : i32
    %c0_i32_0 = arith.constant 0 : i32
    return %arg0, %c0_i32 : i32, i32
  }
  func.func @transform_1(%arg0: i32) -> (i32, i32) {
    %c0_i32 = arith.constant 0 : i32
    %c0_i32_0 = arith.constant 0 : i32
    return %arg0, %c0_i32 : i32, i32
  }
  func.func @transform_2(%arg0: i32) -> (i32, i32) {
    %c0_i32 = arith.constant 0 : i32
    %c0_i32_0 = arith.constant 0 : i32
    %c0_i32_1 = arith.constant 0 : i32
    return %c0_i32, %c0_i32_0 : i32, i32
  }
  func.func @transform_3(%arg0: i32) -> (i32, i32) {
    %c0_i32 = arith.constant 0 : i32
    %c0_i32_0 = arith.constant 0 : i32
    %c0_i32_1 = arith.constant 0 : i32
    return %c0_i32, %c0_i32_0 : i32, i32
  }
  func.func @transform_4(%arg0: i32) -> (i32, i32) {
    %c0_i32 = arith.constant 0 : i32
    %c0_i32_0 = arith.constant 0 : i32
    %c0_i32_1 = arith.constant 0 : i32
    return %c0_i32, %c0_i32_0 : i32, i32
  }
  func.func @transform_5(%arg0: i32) -> (i32, i32) {
    %c0_i32 = arith.constant 0 : i32
    %c0_i32_0 = arith.constant 0 : i32
    %c0_i32_1 = arith.constant 0 : i32
    return %c0_i32, %c0_i32_0 : i32, i32
  }
  func.func @transform_6(%arg0: i32) -> (i32, i32) {
    %c0_i32 = arith.constant 0 : i32
    %c0_i32_0 = arith.constant 0 : i32
    %c0_i32_1 = arith.constant 0 : i32
    return %c0_i32, %c0_i32_0 : i32, i32
  }
  func.func @transform_7(%arg0: i32) -> (i32, i32) {
    %c0_i32 = arith.constant 0 : i32
    %c0_i32_0 = arith.constant 0 : i32
    %c0_i32_1 = arith.constant 0 : i32
    return %c0_i32, %c0_i32_0 : i32, i32
  }
  func.func @transform_8(%arg0: i32) -> (i32, i32) {
    %c0_i32 = arith.constant 0 : i32
    %c0_i32_0 = arith.constant 0 : i32
    %c0_i32_1 = arith.constant 0 : i32
    return %c0_i32, %c0_i32_0 : i32, i32
  }
  func.func @transform_9(%arg0: i32) -> (i32, i32) {
    %c0_i32 = arith.constant 0 : i32
    %c0_i32_0 = arith.constant 0 : i32
    %c0_i32_1 = arith.constant 0 : i32
    return %c0_i32, %c0_i32_0 : i32, i32
  }
  func.func @transform_10(%arg0: i32) -> (i32, i32) {
    %c0_i32 = arith.constant 0 : i32
    %c0_i32_0 = arith.constant 0 : i32
    %c0_i32_1 = arith.constant 0 : i32
    return %c0_i32, %c0_i32_0 : i32, i32
  }
  func.func @transform_11(%arg0: i32) -> (i32, i32) {
    %c0_i32 = arith.constant 0 : i32
    %c0_i32_0 = arith.constant 0 : i32
    return %arg0, %c0_i32 : i32, i32
  }
}

</mosaic_0001>

<llo_original>
// kernel: tpu_custom_call.1
$region0: #{tpu_custom_call.1}
  #allocation0 [shape = 'u32[]', space=smem, size = 0x4, offset = 0x4, fixed_abs, tag = 'smem constant byte address 0x4 - core index']
  #allocation1 [shape = 'u32[144,128]{1,0:T(1,128)}', space=vmem, size = 0x12000, scoped, tag = 'internal scratch']
  #allocation2 [shape = 'f32[1,1]{1,0:T(1,128)S(1)}', space=vmem, size = 0x200, scoped, tag = 'scoped memory for tpu_custom_call.1']
  %s0 = inlined_call_operand.vmem [shape: f32[8,2], index: 0, kind: input, shape index: {}]
  %s1 = inlined_call_operand.vmem [shape: f32[8,6], index: 1, kind: input, shape index: {}]
  %s2 = inlined_call_operand.hbm [shape: bf16[2,512], index: 2, kind: input, shape index: {}]
  %s3 = inlined_call_operand.vmem [shape: bf16[6,512], index: 3, kind: input, shape index: {}]
  %s4 = inlined_call_operand.vmem [shape: f32[1,512], index: 4, kind: input, shape index: {}]
  %s5 = inlined_call_operand.hbm [shape: bf16[512,512], index: 5, kind: input, shape index: {}]
  %s6 = inlined_call_operand.vmem [shape: f32[1,512], index: 6, kind: input, shape index: {}]
  %s7 = inlined_call_operand.hbm [shape: bf16[512,512], index: 7, kind: input, shape index: {}]
  %s8 = inlined_call_operand.vmem [shape: f32[1,512], index: 8, kind: input, shape index: {}]
  %s9 = inlined_call_operand.vmem [shape: f32[1,512], index: 9, kind: input, shape index: {}]
  %s10 = inlined_call_operand.<no memory space> [shape: f32[1,1], index: 10, kind: input, shape index: {}]
  %s11 = inlined_call_operand.vmem [shape: f32[8,1], index: 11, kind: output, shape index: {}]
  %s12 = sld [smem:[#allocation0]]
  $region66: #{tpu_custom_call.1} parent=0
    _
  %s14 = ssub.s32 1, %s12
  %s15 = scalar_select 0, %s14, %s12
  %v16 = vstv %s10
  %17 = vst [vmem:[#allocation2] sm:$0x1] %v16
  $region1: #{tpu_custom_call.1} parent=0
    #allocation3 [shape = 'u8[2048]{0}', space=vmem, size = 0x800, scoped, tag = 'input window, operand 2, single buffered']
    #allocation4 [shape = 's32[1]{0}', space=sflag, size = 0x4, scoped, tag = 'scoped memory for tpu_custom_call.1']
    #allocation5 [shape = 'u8[524288]{0}', space=vmem, size = 0x80000, scoped, tag = 'input window, operand 5, single buffered']
    #allocation6 [shape = 's32[1]{0}', space=sflag, size = 0x4, scoped, tag = 'scoped memory for tpu_custom_call.1']
    #allocation7 [shape = 'u8[524288]{0}', space=vmem, size = 0x80000, scoped, tag = 'input window, operand 7, single buffered']
    %18 = vsyncpa [#allocation4], 0
    %19 = vsyncpa [#allocation6], 0
    // Predicated region
    $region2: #{tpu_custom_call.1} parent=1 // pred_check
      _
    $region3: #{tpu_custom_call.1} parent=1 // pred_check_branch
      %21 = sbr.rel (0) target = $region5
    $region4: #{tpu_custom_call.1} parent=1 // pred_region
      _
    $region5: #{tpu_custom_call.1} parent=1 // pred_fallthru
      _
    // Predicated region
    $region6: #{tpu_custom_call.1} parent=1 // pred_check
      _
    $region7: #{tpu_custom_call.1} parent=1 // pred_check_branch
      %23 = sbr.rel (0) target = $region9
    $region8: #{tpu_custom_call.1} parent=1 // pred_region
      _
    $region9: #{tpu_custom_call.1} parent=1 // pred_fallthru
      _
    // Predicated region
    $region10: #{tpu_custom_call.1} parent=1 // pred_check
      _
    $region11: #{tpu_custom_call.1} parent=1 // pred_check_branch
      %25 = sbr.rel (0) target = $region13
    $region12: #{tpu_custom_call.1} parent=1 // pred_region
      %s27 = ssub.s32 64, 64
      %28 = vsyncadd [#allocation4], %s27
      %s30 = sshll.u32 [#allocation3], 4
      %s31 = int_to_ptr.vmem [resolvable:$true] %s30
      %33 = dma.hbm_to_vmem [thread:$0]  %s2, 64, %s31, [#allocation4]
    $region13: #{tpu_custom_call.1} parent=1 // pred_fallthru
      _
    // Predicated region
    $region14: #{tpu_custom_call.1} parent=1 // pred_check
      _
    $region15: #{tpu_custom_call.1} parent=1 // pred_check_branch
      %35 = sbr.rel (0) target = $region17
    $region16: #{tpu_custom_call.1} parent=1 // pred_region
      _
    $region17: #{tpu_custom_call.1} parent=1 // pred_fallthru
      _
    // Predicated region
    $region18: #{tpu_custom_call.1} parent=1 // pred_check
      _
    $region19: #{tpu_custom_call.1} parent=1 // pred_check_branch
      %37 = sbr.rel (0) target = $region21
    $region20: #{tpu_custom_call.1} parent=1 // pred_region
      _
    $region21: #{tpu_custom_call.1} parent=1 // pred_fallthru
      _
    // Predicated region
    $region22: #{tpu_custom_call.1} parent=1 // pred_check
      _
    $region23: #{tpu_custom_call.1} parent=1 // pred_check_branch
      %39 = sbr.rel (0) target = $region25
    $region24: #{tpu_custom_call.1} parent=1 // pred_region
      %s41 = ssub.s32 16384, 16384
      %42 = vsyncadd [#allocation6], %s41
      %s43 = sshll.u32 [#allocation5], 4
      %s44 = int_to_ptr.vmem [resolvable:$true] %s43
      %49 = dma.hbm_to_vmem [thread:$0]  %s5, 16384, %s44, [#allocation6], 256, 256, 16
    $region25: #{tpu_custom_call.1} parent=1 // pred_fallthru
      _
    // Predicated region
    $region26: #{tpu_custom_call.1} parent=1 // pred_check
      _
    $region27: #{tpu_custom_call.1} parent=1 // pred_check_branch
      %51 = sbr.rel (0) target = $region29
    $region28: #{tpu_custom_call.1} parent=1 // pred_region
      _
    $region29: #{tpu_custom_call.1} parent=1 // pred_fallthru
      _
    // Predicated region
    $region30: #{tpu_custom_call.1} parent=1 // pred_check
      _
    $region31: #{tpu_custom_call.1} parent=1 // pred_check_branch
      %53 = sbr.rel (0) target = $region33
    $region32: #{tpu_custom_call.1} parent=1 // pred_region
      %s55 = ssub.s32 16384, 16384
      %56 = vsyncadd [#allocation6], %s55
      %s57 = sshll.u32 [#allocation7], 4
      %s58 = int_to_ptr.vmem [resolvable:$true] %s57
      %63 = dma.hbm_to_vmem [thread:$0]  %s7, 16384, %s58, [#allocation6], 256, 256, 16
    $region33: #{tpu_custom_call.1} parent=1 // pred_fallthru
      _
    // Predicated region
    $region34: #{tpu_custom_call.1} parent=1 // pred_check
      _
    $region35: #{tpu_custom_call.1} parent=1 // pred_check_branch
      %65 = sbr.rel (0) target = $region37
    $region36: #{tpu_custom_call.1} parent=1 // pred_region
      _
    $region37: #{tpu_custom_call.1} parent=1 // pred_fallthru
      _
    // Predicated region
    $region38: #{tpu_custom_call.1} parent=1 // pred_check
      _
    $region39: #{tpu_custom_call.1} parent=1 // pred_check_branch
      %67 = sbr.rel (0) target = $region41
    $region40: #{tpu_custom_call.1} parent=1 // pred_region
      _
    $region41: #{tpu_custom_call.1} parent=1 // pred_fallthru
      _
    // Predicated region
    $region42: #{tpu_custom_call.1} parent=1 // pred_check
      _
    $region43: #{tpu_custom_call.1} parent=1 // pred_check_branch
      %69 = sbr.rel (0) target = $region45
    $region44: #{tpu_custom_call.1} parent=1 // pred_region
      _
    $region45: #{tpu_custom_call.1} parent=1 // pred_fallthru
      _
    // Predicated region
    $region46: #{tpu_custom_call.1} parent=1 // pred_check
      _
    $region47: #{tpu_custom_call.1} parent=1 // pred_check_branch
      %71 = sbr.rel (0) target = $region49
    $region48: #{tpu_custom_call.1} parent=1 // pred_region
      %72 = dma.done [#allocation4], 64
    $region49: #{tpu_custom_call.1} parent=1 // pred_fallthru
      _
    // Predicated region
    $region50: #{tpu_custom_call.1} parent=1 // pred_check
      _
    $region51: #{tpu_custom_call.1} parent=1 // pred_check_branch
      %74 = sbr.rel (0) target = $region53
    $region52: #{tpu_custom_call.1} parent=1 // pred_region
      %75 = dma.done [#allocation6], 16384
    $region53: #{tpu_custom_call.1} parent=1 // pred_fallthru
      _
    // Predicated region
    $region54: #{tpu_custom_call.1} parent=1 // pred_check
      _
    $region55: #{tpu_custom_call.1} parent=1 // pred_check_branch
      %77 = sbr.rel (0) target = $region57
    $region56: #{tpu_custom_call.1} parent=1 // pred_region
      %78 = dma.done [#allocation6], 16384
    $region57: #{tpu_custom_call.1} parent=1 // pred_fallthru
      _
    %v80 = vld [vmem:[%s0] sm:$0xff]
    %v81 = vpack.c.bf16 %v80, %v80
    %v82 = vld [vmem:[#allocation3] sm:$0xf]
    %v83 = vld [vmem:[%s1] sm:$0xff]
    %v84 = vpack.c.bf16 %v83, %v83
    %v85 = vld [vmem:[%s3] sm:$0x77]
    %v86 = vld [vmem:[%s3 + $0x8] sm:$0x77]
    %v89 = vunpack.c.l.b16 %v85
    %v90 = vunpack.c.h.b16 %v85
    %v91 = vunpack.c.l.b16 %v86
    %v92 = vunpack.c.h.b16 %v86
    %v93 = vpack.c.b16 %v89, %v89
    %v94 = vpack.c.b16 %v90, %v90
    %v95 = vpack.c.b16 %v91, %v91
    %v96 = vpack.c.b16 %v92, %v92
    %vm97 = vcmask 48128
    %v99 = vsel %vm97, %v84, 0
    %vm101 = vcmask 1042432
    %v103 = vsel %vm101, %v93, 0
    %v106 = vsel %vm101, %v94, 0
    %v109 = vsel %vm101, %v95, 0
    %v112 = vsel %vm101, %v96, 0
    %114 = vmatprep.subr.bf16.mxu0 %v106
    %115 = vmatpush1.bf16.msra.mxu0 %v103
    %116 = vmatprep.subr.bf16.mxu0 0
    %117 = vmatpush1.bf16.msra.mxu0 0
    %118 = vmatprep.subr.bf16.mxu0 0
    %119 = vmatpush1.bf16.msra.mxu0 0
    %120 = vmatprep.subr.bf16.mxu0 0
    %121 = vmatpush1.bf16.msra.mxu0 0
    %122 = vmatprep.subr.bf16.mxu0 0
    %123 = vmatpush1.bf16.msra.mxu0 0
    %124 = vmatprep.subr.bf16.mxu0 0
    %125 = vmatpush1.bf16.msra.mxu0 0
    %126 = vmatprep.subr.bf16.mxu0 0
    %127 = vmatpush1.bf16.msra.mxu0 0
    %128 = vmatprep.subr.bf16.mxu0 0
    %129 = vmatpush1.bf16.msra.mxu0 0
    %130 = vmatprep.subr.bf16.mxu0 0
    %131 = vmatpush1.bf16.msra.mxu0 0
    %132 = vmatprep.subr.bf16.mxu0 0
    %133 = vmatpush1.bf16.msra.mxu0 0
    %134 = vmatprep.subr.bf16.mxu0 0
    %135 = vmatpush1.bf16.msra.mxu0 0
    %136 = vmatprep.subr.bf16.mxu0 0
    %137 = vmatpush1.bf16.msra.mxu0 0
    %138 = vmatprep.subr.bf16.mxu0 0
    %139 = vmatpush1.bf16.msra.mxu0 0
    %140 = vmatprep.subr.bf16.mxu0 0
    %141 = vmatpush1.bf16.msra.mxu0 0
    %142 = vmatprep.subr.bf16.mxu0 0
    %143 = vmatpush1.bf16.msra.mxu0 0
    %144 = vmatprep.subr.bf16.mxu0 0
    %145 = vmatpush1.bf16.msra.mxu0 0
    %146 = vmatprep.mubr.bf16.mxu0 0
    %147 = vmatmul.mubr.bf16.gmra.mrb[0].mxu0 %v99
    %v148 = vpop.f32.mrb[0].mxu0
    %v149 = vadd.f32 0.0, %v148
    %v150 = vpop.f32.mrb[0].mxu0
    %v151 = vadd.f32 0.0, %v150
    %v152 = vpop.f32.mrb[0].mxu0
    %v153 = vpop.f32.mrb[0].mxu0
    %154 = vdwg.mxu0
    %155 = vmatprep.subr.bf16.mxu0 %v112
    %156 = vmatpush1.bf16.msra.mxu0 %v109
    %157 = vmatprep.subr.bf16.mxu0 0
    %158 = vmatpush1.bf16.msra.mxu0 0
    %159 = vmatprep.subr.bf16.mxu0 0
    %160 = vmatpush1.bf16.msra.mxu0 0
    %161 = vmatprep.subr.bf16.mxu0 0
    %162 = vmatpush1.bf16.msra.mxu0 0
    %163 = vmatprep.subr.bf16.mxu0 0
    %164 = vmatpush1.bf16.msra.mxu0 0
    %165 = vmatprep.subr.bf16.mxu0 0
    %166 = vmatpush1.bf16.msra.mxu0 0
    %167 = vmatprep.subr.bf16.mxu0 0
    %168 = vmatpush1.bf16.msra.mxu0 0
    %169 = vmatprep.subr.bf16.mxu0 0
    %170 = vmatpush1.bf16.msra.mxu0 0
    %171 = vmatprep.subr.bf16.mxu0 0
    %172 = vmatpush1.bf16.msra.mxu0 0
    %173 = vmatprep.subr.bf16.mxu0 0
    %174 = vmatpush1.bf16.msra.mxu0 0
    %175 = vmatprep.subr.bf16.mxu0 0
    %176 = vmatpush1.bf16.msra.mxu0 0
    %177 = vmatprep.subr.bf16.mxu0 0
    %178 = vmatpush1.bf16.msra.mxu0 0
    %179 = vmatprep.subr.bf16.mxu0 0
    %180 = vmatpush1.bf16.msra.mxu0 0
    %181 = vmatprep.subr.bf16.mxu0 0
    %182 = vmatpush1.bf16.msra.mxu0 0
    %183 = vmatprep.subr.bf16.mxu0 0
    %184 = vmatpush1.bf16.msra.mxu0 0
    %185 = vmatprep.subr.bf16.mxu0 0
    %186 = vmatpush1.bf16.msra.mxu0 0
    %187 = vmatprep.mubr.bf16.mxu0 0
    %188 = vmatmul.mubr.bf16.gmra.mrb[0].mxu0 %v99
    %v189 = vpop.f32.mrb[0].mxu0
    %v190 = vadd.f32 0.0, %v189
    %v191 = vpop.f32.mrb[0].mxu0
    %v192 = vadd.f32 0.0, %v191
    %v193 = vpop.f32.mrb[0].mxu0
    %v194 = vpop.f32.mrb[0].mxu0
    %195 = vdwg.mxu0
    %v198 = vunpack.c.l.s4 1966171168
    %v199 = vunpack.c.0.s8 %v198
    %v200 = vlaneseq
    %v201 = vshrl.u32 %v200, 7
    %v202 = vsub.s32 %v199, %v201
    %v203 = vrot.slane %v82, %v202
    %v204 = vcombine.high %v203, %v203
    %v206 = vunpack.c.l.s4 1966171168
    %v207 = vunpack.c.0.s8 %v206
    %v208 = vlaneseq
    %v209 = vshrl.u32 %v208, 7
    %v210 = vsub.s32 %v207, %v209
    %v211 = vrot.slane %v203, %v210
    %v213 = vunpack.c.l.s4 1966171168
    %v214 = vunpack.c.0.s8 %v213
    %v215 = vlaneseq
    %v216 = vshrl.u32 %v215, 7
    %v217 = vsub.s32 %v214, %v216
    %v218 = vrot.slane %v204, %v217
    %v219 = vcombine.high %v211, %v211
    %v220 = vcombine.high %v218, %v218
    %vm221 = vcmask 15360
    %v223 = vsel %vm221, %v81, 0
    %vm225 = vcmask 1040384
    %v227 = vsel %vm225, %v211, 0
    %v230 = vsel %vm225, %v218, 0
    %v233 = vsel %vm225, %v219, 0
    %v236 = vsel %vm225, %v220, 0
    %238 = vmatprep.subr.bf16.mxu0 %v230
    %239 = vmatpush1.bf16.msra.mxu0 %v227
    %240 = vmatprep.subr.bf16.mxu0 0
    %241 = vmatpush1.bf16.msra.mxu0 0
    %242 = vmatprep.subr.bf16.mxu0 0
    %243 = vmatpush1.bf16.msra.mxu0 0
    %244 = vmatprep.subr.bf16.mxu0 0
    %245 = vmatpush1.bf16.msra.mxu0 0
    %246 = vmatprep.subr.bf16.mxu0 0
    %247 = vmatpush1.bf16.msra.mxu0 0
    %248 = vmatprep.subr.bf16.mxu0 0
    %249 = vmatpush1.bf16.msra.mxu0 0
    %250 = vmatprep.subr.bf16.mxu0 0
    %251 = vmatpush1.bf16.msra.mxu0 0
    %252 = vmatprep.subr.bf16.mxu0 0
    %253 = vmatpush1.bf16.msra.mxu0 0
    %254 = vmatprep.subr.bf16.mxu0 0
    %255 = vmatpush1.bf16.msra.mxu0 0
    %256 = vmatprep.subr.bf16.mxu0 0
    %257 = vmatpush1.bf16.msra.mxu0 0
    %258 = vmatprep.subr.bf16.mxu0 0
    %259 = vmatpush1.bf16.msra.mxu0 0
    %260 = vmatprep.subr.bf16.mxu0 0
    %261 = vmatpush1.bf16.msra.mxu0 0
    %262 = vmatprep.subr.bf16.mxu0 0
    %263 = vmatpush1.bf16.msra.mxu0 0
    %264 = vmatprep.subr.bf16.mxu0 0
    %265 = vmatpush1.bf16.msra.mxu0 0
    %266 = vmatprep.subr.bf16.mxu0 0
    %267 = vmatpush1.bf16.msra.mxu0 0
    %268 = vmatprep.subr.bf16.mxu0 0
    %269 = vmatpush1.bf16.msra.mxu0 0
    %270 = vmatprep.mubr.bf16.mxu0 0
    %271 = vmatmul.mubr.bf16.gmra.mrb[0].mxu0 %v223
    %v272 = vpop.f32.mrb[0].mxu0
    %v273 = vadd.f32 %v149, %v272
    %v274 = vpop.f32.mrb[0].mxu0
    %v275 = vadd.f32 %v151, %v274
    %v276 = vpop.f32.mrb[0].mxu0
    %v277 = vpop.f32.mrb[0].mxu0
    %278 = vdwg.mxu0
    %279 = vmatprep.subr.bf16.mxu0 %v236
    %280 = vmatpush1.bf16.msra.mxu0 %v233
    %281 = vmatprep.subr.bf16.mxu0 0
    %282 = vmatpush1.bf16.msra.mxu0 0
    %283 = vmatprep.subr.bf16.mxu0 0
    %284 = vmatpush1.bf16.msra.mxu0 0
    %285 = vmatprep.subr.bf16.mxu0 0
    %286 = vmatpush1.bf16.msra.mxu0 0
    %287 = vmatprep.subr.bf16.mxu0 0
    %288 = vmatpush1.bf16.msra.mxu0 0
    %289 = vmatprep.subr.bf16.mxu0 0
    %290 = vmatpush1.bf16.msra.mxu0 0
    %291 = vmatprep.subr.bf16.mxu0 0
    %292 = vmatpush1.bf16.msra.mxu0 0
    %293 = vmatprep.subr.bf16.mxu0 0
    %294 = vmatpush1.bf16.msra.mxu0 0
    %295 = vmatprep.subr.bf16.mxu0 0
    %296 = vmatpush1.bf16.msra.mxu0 0
    %297 = vmatprep.subr.bf16.mxu0 0
    %298 = vmatpush1.bf16.msra.mxu0 0
    %299 = vmatprep.subr.bf16.mxu0 0
    %300 = vmatpush1.bf16.msra.mxu0 0
    %301 = vmatprep.subr.bf16.mxu0 0
    %302 = vmatpush1.bf16.msra.mxu0 0
    %303 = vmatprep.subr.bf16.mxu0 0
    %304 = vmatpush1.bf16.msra.mxu0 0
    %305 = vmatprep.subr.bf16.mxu0 0
    %306 = vmatpush1.bf16.msra.mxu0 0
    %307 = vmatprep.subr.bf16.mxu0 0
    %308 = vmatpush1.bf16.msra.mxu0 0
    %309 = vmatprep.subr.bf16.mxu0 0
    %310 = vmatpush1.bf16.msra.mxu0 0
    %311 = vmatprep.mubr.bf16.mxu0 0
    %312 = vmatmul.mubr.bf16.gmra.mrb[0].mxu0 %v223
    %v313 = vpop.f32.mrb[0].mxu0
    %v314 = vadd.f32 %v190, %v313
    %v315 = vpop.f32.mrb[0].mxu0
    %v316 = vadd.f32 %v192, %v315
    %v317 = vpop.f32.mrb[0].mxu0
    %v318 = vpop.f32.mrb[0].mxu0
    %319 = vdwg.mxu0
    %v320 = vld [vmem:[%s4] sm:$0xf]
    %v322 = vlaneseq
    %v323 = vshrl.u32 %v322, 7
    %v324 = vsub.s32 0, %v323
    %v325 = vrot.slane %v320, %v324
    %v326 = vlaneseq
    %v327 = vshrl.u32 %v326, 7
    %v328 = vsub.s32 1, %v327
    %v329 = vrot.slane %v320, %v328
    %v330 = vlaneseq
    %v331 = vshrl.u32 %v330, 7
    %v332 = vsub.s32 2, %v331
    %v333 = vrot.slane %v320, %v332
    %v334 = vlaneseq
    %v335 = vshrl.u32 %v334, 7
    %v336 = vsub.s32 3, %v335
    %v337 = vrot.slane %v320, %v336
    %v342 = vadd.f32 %v273, %v325
    %v343 = vadd.f32 %v275, %v329
    %v344 = vadd.f32 %v314, %v333
    %v345 = vadd.f32 %v316, %v337
    %v346 = vmax.f32 %v342, 0.0
    %v347 = vmax.f32 %v343, 0.0
    %v348 = vmax.f32 %v344, 0.0
    %v349 = vmax.f32 %v345, 0.0
    %v350 = vpack.c.bf16 %v346, %v346
    %v351 = vpack.c.bf16 %v347, %v347
    %v352 = vpack.c.bf16 %v348, %v348
    %v353 = vpack.c.bf16 %v349, %v349
    %v354 = vld [vmem:[#allocation5] sm:$0xff]
    %v355 = vld [vmem:[#allocation5 + $0x8] sm:$0xff]
    %v356 = vld [vmem:[#allocation5 + $0x10] sm:$0xff]
    %v357 = vld [vmem:[#allocation5 + $0x18] sm:$0xff]
    %v358 = vld [vmem:[#allocation5 + $0x20] sm:$0xff]
    %v359 = vld [vmem:[#allocation5 + $0x28] sm:$0xff]
    %v360 = vld [vmem:[#allocation5 + $0x30] sm:$0xff]
    %v361 = vld [vmem:[#allocation5 + $0x38] sm:$0xff]
    %v362 = vld [vmem:[#allocation5 + $0x40] sm:$0xff]
    %v363 = vld [vmem:[#allocation5 + $0x48] sm:$0xff]
    %v364 = vld [vmem:[#allocation5 + $0x50] sm:$0xff]
    %v365 = vld [vmem:[#allocation5 + $0x58] sm:$0xff]
    %v366 = vld [vmem:[#allocation5 + $0x60] sm:$0xff]
    %v367 = vld [vmem:[#allocation5 + $0x68] sm:$0xff]
    %v368 = vld [vmem:[#allocation5 + $0x70] sm:$0xff]
    %v369 = vld [vmem:[#allocation5 + $0x78] sm:$0xff]
    %v370 = vld [vmem:[#allocation5 + $0x80] sm:$0xff]
    %v371 = vld [vmem:[#allocation5 + $0x88] sm:$0xff]
    %v372 = vld [vmem:[#allocation5 + $0x90] sm:$0xff]
    %v373 = vld [vmem:[#allocation5 + $0x98] sm:$0xff]
    %v374 = vld [vmem:[#allocation5 + $0xa0] sm:$0xff]
    %v375 = vld [vmem:[#allocation5 + $0xa8] sm:$0xff]
    %v376 = vld [vmem:[#allocation5 + $0xb0] sm:$0xff]
    %v377 = vld [vmem:[#allocation5 + $0xb8] sm:$0xff]
    %v378 = vld [vmem:[#allocation5 + $0xc0] sm:$0xff]
    %v379 = vld [vmem:[#allocation5 + $0xc8] sm:$0xff]
    %v380 = vld [vmem:[#allocation5 + $0xd0] sm:$0xff]
    %v381 = vld [vmem:[#allocation5 + $0xd8] sm:$0xff]
    %v382 = vld [vmem:[#allocation5 + $0xe0] sm:$0xff]
    %v383 = vld [vmem:[#allocation5 + $0xe8] sm:$0xff]
    %v384 = vld [vmem:[#allocation5 + $0xf0] sm:$0xff]
    %v385 = vld [vmem:[#allocation5 + $0xf8] sm:$0xff]
    %v386 = vld [vmem:[#allocation5 + $0x100] sm:$0xff]
    %v387 = vld [vmem:[#allocation5 + $0x108] sm:$0xff]
    %v388 = vld [vmem:[#allocation5 + $0x110] sm:$0xff]
    %v389 = vld [vmem:[#allocation5 + $0x118] sm:$0xff]
    %v390 = vld [vmem:[#allocation5 + $0x120] sm:$0xff]
    %v391 = vld [vmem:[#allocation5 + $0x128] sm:$0xff]
    %v392 = vld [vmem:[#allocation5 + $0x130] sm:$0xff]
    %v393 = vld [vmem:[#allocation5 + $0x138] sm:$0xff]
    %v394 = vld [vmem:[#allocation5 + $0x140] sm:$0xff]
    %v395 = vld [vmem:[#allocation5 + $0x148] sm:$0xff]
    %v396 = vld [vmem:[#allocation5 + $0x150] sm:$0xff]
    %v397 = vld [vmem:[#allocation5 + $0x158] sm:$0xff]
    %v398 = vld [vmem:[#allocation5 + $0x160] sm:$0xff]
    %v399 = vld [vmem:[#allocation5 + $0x168] sm:$0xff]
    %v400 = vld [vmem:[#allocation5 + $0x170] sm:$0xff]
    %v401 = vld [vmem:[#allocation5 + $0x178] sm:$0xff]
    %v402 = vld [vmem:[#allocation5 + $0x180] sm:$0xff]
    %v403 = vld [vmem:[#allocation5 + $0x188] sm:$0xff]
    %v404 = vld [vmem:[#allocation5 + $0x190] sm:$0xff]
    %v405 = vld [vmem:[#allocation5 + $0x198] sm:$0xff]
    %v406 = vld [vmem:[#allocation5 + $0x1a0] sm:$0xff]
    %v407 = vld [vmem:[#allocation5 + $0x1a8] sm:$0xff]
    %v408 = vld [vmem:[#allocation5 + $0x1b0] sm:$0xff]
    %v409 = vld [vmem:[#allocation5 + $0x1b8] sm:$0xff]
    %v410 = vld [vmem:[#allocation5 + $0x1c0] sm:$0xff]
    %v411 = vld [vmem:[#allocation5 + $0x1c8] sm:$0xff]
    %v412 = vld [vmem:[#allocation5 + $0x1d0] sm:$0xff]
    %v413 = vld [vmem:[#allocation5 + $0x1d8] sm:$0xff]
    %v414 = vld [vmem:[#allocation5 + $0x1e0] sm:$0xff]
    %v415 = vld [vmem:[#allocation5 + $0x1e8] sm:$0xff]
    %v416 = vld [vmem:[#allocation5 + $0x1f0] sm:$0xff]
    %v417 = vld [vmem:[#allocation5 + $0x1f8] sm:$0xff]
    %v418 = vld [vmem:[#allocation5 + $0x200] sm:$0xff]
    %v419 = vld [vmem:[#allocation5 + $0x208] sm:$0xff]
    %v420 = vld [vmem:[#allocation5 + $0x210] sm:$0xff]
    %v421 = vld [vmem:[#allocation5 + $0x218] sm:$0xff]
    %v422 = vld [vmem:[#allocation5 + $0x220] sm:$0xff]
    %v423 = vld [vmem:[#allocation5 + $0x228] sm:$0xff]
    %v424 = vld [vmem:[#allocation5 + $0x230] sm:$0xff]
    %v425 = vld [vmem:[#allocation5 + $0x238] sm:$0xff]
    %v426 = vld [vmem:[#allocation5 + $0x240] sm:$0xff]
    %v427 = vld [vmem:[#allocation5 + $0x248] sm:$0xff]
    %v428 = vld [vmem:[#allocation5 + $0x250] sm:$0xff]
    %v429 = vld [vmem:[#allocation5 + $0x258] sm:$0xff]
    %v430 = vld [vmem:[#allocation5 + $0x260] sm:$0xff]
    %v431 = vld [vmem:[#allocation5 + $0x268] sm:$0xff]
    %v432 = vld [vmem:[#allocation5 + $0x270] sm:$0xff]
    %v433 = vld [vmem:[#allocation5 + $0x278] sm:$0xff]
    %v434 = vld [vmem:[#allocation5 + $0x280] sm:$0xff]
    %v435 = vld [vmem:[#allocation5 + $0x288] sm:$0xff]
    %v436 = vld [vmem:[#allocation5 + $0x290] sm:$0xff]
    %v437 = vld [vmem:[#allocation5 + $0x298] sm:$0xff]
    %v438 = vld [vmem:[#allocation5 + $0x2a0] sm:$0xff]
    %v439 = vld [vmem:[#allocation5 + $0x2a8] sm:$0xff]
    %v440 = vld [vmem:[#allocation5 + $0x2b0] sm:$0xff]
    %v441 = vld [vmem:[#allocation5 + $0x2b8] sm:$0xff]
    %v442 = vld [vmem:[#allocation5 + $0x2c0] sm:$0xff]
    %v443 = vld [vmem:[#allocation5 + $0x2c8] sm:$0xff]
    %v444 = vld [vmem:[#allocation5 + $0x2d0] sm:$0xff]
    %v445 = vld [vmem:[#allocation5 + $0x2d8] sm:$0xff]
    %v446 = vld [vmem:[#allocation5 + $0x2e0] sm:$0xff]
    %v447 = vld [vmem:[#allocation5 + $0x2e8] sm:$0xff]
    %v448 = vld [vmem:[#allocation5 + $0x2f0] sm:$0xff]
    %v449 = vld [vmem:[#allocation5 + $0x2f8] sm:$0xff]
    %v450 = vld [vmem:[#allocation5 + $0x300] sm:$0xff]
    %v451 = vld [vmem:[#allocation5 + $0x308] sm:$0xff]
    %v452 = vld [vmem:[#allocation5 + $0x310] sm:$0xff]
    %v453 = vld [vmem:[#allocation5 + $0x318] sm:$0xff]
    %v454 = vld [vmem:[#allocation5 + $0x320] sm:$0xff]
    %v455 = vld [vmem:[#allocation5 + $0x328] sm:$0xff]
    %v456 = vld [vmem:[#allocation5 + $0x330] sm:$0xff]
    %v457 = vld [vmem:[#allocation5 + $0x338] sm:$0xff]
    %v458 = vld [vmem:[#allocation5 + $0x340] sm:$0xff]
    %v459 = vld [vmem:[#allocation5 + $0x348] sm:$0xff]
    %v460 = vld [vmem:[#allocation5 + $0x350] sm:$0xff]
    %v461 = vld [vmem:[#allocation5 + $0x358] sm:$0xff]
    %v462 = vld [vmem:[#allocation5 + $0x360] sm:$0xff]
    %v463 = vld [vmem:[#allocation5 + $0x368] sm:$0xff]
    %v464 = vld [vmem:[#allocation5 + $0x370] sm:$0xff]
    %v465 = vld [vmem:[#allocation5 + $0x378] sm:$0xff]
    %v466 = vld [vmem:[#allocation5 + $0x380] sm:$0xff]
    %v467 = vld [vmem:[#allocation5 + $0x388] sm:$0xff]
    %v468 = vld [vmem:[#allocation5 + $0x390] sm:$0xff]
    %v469 = vld [vmem:[#allocation5 + $0x398] sm:$0xff]
    %v470 = vld [vmem:[#allocation5 + $0x3a0] sm:$0xff]
    %v471 = vld [vmem:[#allocation5 + $0x3a8] sm:$0xff]
    %v472 = vld [vmem:[#allocation5 + $0x3b0] sm:$0xff]
    %v473 = vld [vmem:[#allocation5 + $0x3b8] sm:$0xff]
    %v474 = vld [vmem:[#allocation5 + $0x3c0] sm:$0xff]
    %v475 = vld [vmem:[#allocation5 + $0x3c8] sm:$0xff]
    %v476 = vld [vmem:[#allocation5 + $0x3d0] sm:$0xff]
    %v477 = vld [vmem:[#allocation5 + $0x3d8] sm:$0xff]
    %v478 = vld [vmem:[#allocation5 + $0x3e0] sm:$0xff]
    %v479 = vld [vmem:[#allocation5 + $0x3e8] sm:$0xff]
    %v480 = vld [vmem:[#allocation5 + $0x3f0] sm:$0xff]
    %v481 = vld [vmem:[#allocation5 + $0x3f8] sm:$0xff]
    %v482 = vld [vmem:[%s6] sm:$0xf]
    %v484 = vlaneseq
    %v485 = vshrl.u32 %v484, 7
    %v486 = vsub.s32 0, %v485
    %v487 = vrot.slane %v482, %v486
    %v488 = vlaneseq
    %v489 = vshrl.u32 %v488, 7
    %v490 = vsub.s32 1, %v489
    %v491 = vrot.slane %v482, %v490
    %v492 = vlaneseq
    %v493 = vshrl.u32 %v492, 7
    %v494 = vsub.s32 2, %v493
    %v495 = vrot.slane %v482, %v494
    %v496 = vlaneseq
    %v497 = vshrl.u32 %v496, 7
    %v498 = vsub.s32 3, %v497
    %v499 = vrot.slane %v482, %v498
    %v632 = vunpack.c.l.b16 %v354
    %v633 = vunpack.c.h.b16 %v354
    %v634 = vunpack.c.l.b16 %v355
    %v635 = vunpack.c.h.b16 %v355
    %v636 = vunpack.c.l.b16 %v356
    %v637 = vunpack.c.h.b16 %v356
    %v638 = vunpack.c.l.b16 %v357
    %v639 = vunpack.c.h.b16 %v357
    %v640 = vunpack.c.l.b16 %v358
    %v641 = vunpack.c.h.b16 %v358
    %v642 = vunpack.c.l.b16 %v359
    %v643 = vunpack.c.h.b16 %v359
    %v644 = vunpack.c.l.b16 %v360
    %v645 = vunpack.c.h.b16 %v360
    %v646 = vunpack.c.l.b16 %v361
    %v647 = vunpack.c.h.b16 %v361
    %v648 = vunpack.c.l.b16 %v362
    %v649 = vunpack.c.h.b16 %v362
    %v650 = vunpack.c.l.b16 %v363
    %v651 = vunpack.c.h.b16 %v363
    %v652 = vunpack.c.l.b16 %v364
    %v653 = vunpack.c.h.b16 %v364
    %v654 = vunpack.c.l.b16 %v365
    %v655 = vunpack.c.h.b16 %v365
    %v656 = vunpack.c.l.b16 %v366
    %v657 = vunpack.c.h.b16 %v366
    %v658 = vunpack.c.l.b16 %v367
    %v659 = vunpack.c.h.b16 %v367
    %v660 = vunpack.c.l.b16 %v368
    %v661 = vunpack.c.h.b16 %v368
    %v662 = vunpack.c.l.b16 %v369
    %v663 = vunpack.c.h.b16 %v369
    %v664 = vunpack.c.l.b16 %v370
    %v665 = vunpack.c.h.b16 %v370
    %v666 = vunpack.c.l.b16 %v371
    %v667 = vunpack.c.h.b16 %v371
    %v668 = vunpack.c.l.b16 %v372
    %v669 = vunpack.c.h.b16 %v372
    %v670 = vunpack.c.l.b16 %v373
    %v671 = vunpack.c.h.b16 %v373
    %v672 = vunpack.c.l.b16 %v374
    %v673 = vunpack.c.h.b16 %v374
    %v674 = vunpack.c.l.b16 %v375
    %v675 = vunpack.c.h.b16 %v375
    %v676 = vunpack.c.l.b16 %v376
    %v677 = vunpack.c.h.b16 %v376
    %v678 = vunpack.c.l.b16 %v377
    %v679 = vunpack.c.h.b16 %v377
    %v680 = vunpack.c.l.b16 %v378
    %v681 = vunpack.c.h.b16 %v378
    %v682 = vunpack.c.l.b16 %v379
    %v683 = vunpack.c.h.b16 %v379
    %v684 = vunpack.c.l.b16 %v380
    %v685 = vunpack.c.h.b16 %v380
    %v686 = vunpack.c.l.b16 %v381
    %v687 = vunpack.c.h.b16 %v381
    %v688 = vunpack.c.l.b16 %v382
    %v689 = vunpack.c.h.b16 %v382
    %v690 = vunpack.c.l.b16 %v383
    %v691 = vunpack.c.h.b16 %v383
    %v692 = vunpack.c.l.b16 %v384
    %v693 = vunpack.c.h.b16 %v384
    %v694 = vunpack.c.l.b16 %v385
    %v695 = vunpack.c.h.b16 %v385
    %v696 = vunpack.c.l.b16 %v386
    %v697 = vunpack.c.h.b16 %v386
    %v698 = vunpack.c.l.b16 %v387
    %v699 = vunpack.c.h.b16 %v387
    %v700 = vunpack.c.l.b16 %v388
    %v701 = vunpack.c.h.b16 %v388
    %v702 = vunpack.c.l.b16 %v389
    %v703 = vunpack.c.h.b16 %v389
    %v704 = vunpack.c.l.b16 %v390
    %v705 = vunpack.c.h.b16 %v390
    %v706 = vunpack.c.l.b16 %v391
    %v707 = vunpack.c.h.b16 %v391
    %v708 = vunpack.c.l.b16 %v392
    %v709 = vunpack.c.h.b16 %v392
    %v710 = vunpack.c.l.b16 %v393
    %v711 = vunpack.c.h.b16 %v393
    %v712 = vunpack.c.l.b16 %v394
    %v713 = vunpack.c.h.b16 %v394
    %v714 = vunpack.c.l.b16 %v395
    %v715 = vunpack.c.h.b16 %v395
    %v716 = vunpack.c.l.b16 %v396
    %v717 = vunpack.c.h.b16 %v396
    %v718 = vunpack.c.l.b16 %v397
    %v719 = vunpack.c.h.b16 %v397
    %v720 = vunpack.c.l.b16 %v398
    %v721 = vunpack.c.h.b16 %v398
    %v722 = vunpack.c.l.b16 %v399
    %v723 = vunpack.c.h.b16 %v399
    %v724 = vunpack.c.l.b16 %v400
    %v725 = vunpack.c.h.b16 %v400
    %v726 = vunpack.c.l.b16 %v401
    %v727 = vunpack.c.h.b16 %v401
    %v728 = vunpack.c.l.b16 %v402
    %v729 = vunpack.c.h.b16 %v402
    %v730 = vunpack.c.l.b16 %v403
    %v731 = vunpack.c.h.b16 %v403
    %v732 = vunpack.c.l.b16 %v404
    %v733 = vunpack.c.h.b16 %v404
    %v734 = vunpack.c.l.b16 %v405
    %v735 = vunpack.c.h.b16 %v405
    %v736 = vunpack.c.l.b16 %v406
    %v737 = vunpack.c.h.b16 %v406
    %v738 = vunpack.c.l.b16 %v407
    %v739 = vunpack.c.h.b16 %v407
    %v740 = vunpack.c.l.b16 %v408
    %v741 = vunpack.c.h.b16 %v408
    %v742 = vunpack.c.l.b16 %v409
    %v743 = vunpack.c.h.b16 %v409
    %v744 = vunpack.c.l.b16 %v410
    %v745 = vunpack.c.h.b16 %v410
    %v746 = vunpack.c.l.b16 %v411
    %v747 = vunpack.c.h.b16 %v411
    %v748 = vunpack.c.l.b16 %v412
    %v749 = vunpack.c.h.b16 %v412
    %v750 = vunpack.c.l.b16 %v413
    %v751 = vunpack.c.h.b16 %v413
    %v752 = vunpack.c.l.b16 %v414
    %v753 = vunpack.c.h.b16 %v414
    %v754 = vunpack.c.l.b16 %v415
    %v755 = vunpack.c.h.b16 %v415
    %v756 = vunpack.c.l.b16 %v416
    %v757 = vunpack.c.h.b16 %v416
    %v758 = vunpack.c.l.b16 %v417
    %v759 = vunpack.c.h.b16 %v417
    %v760 = vunpack.c.l.b16 %v418
    %v761 = vunpack.c.h.b16 %v418
    %v762 = vunpack.c.l.b16 %v419
    %v763 = vunpack.c.h.b16 %v419
    %v764 = vunpack.c.l.b16 %v420
    %v765 = vunpack.c.h.b16 %v420
    %v766 = vunpack.c.l.b16 %v421
    %v767 = vunpack.c.h.b16 %v421
    %v768 = vunpack.c.l.b16 %v422
    %v769 = vunpack.c.h.b16 %v422
    %v770 = vunpack.c.l.b16 %v423
    %v771 = vunpack.c.h.b16 %v423
    %v772 = vunpack.c.l.b16 %v424
    %v773 = vunpack.c.h.b16 %v424
    %v774 = vunpack.c.l.b16 %v425
    %v775 = vunpack.c.h.b16 %v425
    %v776 = vunpack.c.l.b16 %v426
    %v777 = vunpack.c.h.b16 %v426
    %v778 = vunpack.c.l.b16 %v427
    %v779 = vunpack.c.h.b16 %v427
    %v780 = vunpack.c.l.b16 %v428
    %v781 = vunpack.c.h.b16 %v428
    %v782 = vunpack.c.l.b16 %v429
    %v783 = vunpack.c.h.b16 %v429
    %v784 = vunpack.c.l.b16 %v430
    %v785 = vunpack.c.h.b16 %v430
    %v786 = vunpack.c.l.b16 %v431
    %v787 = vunpack.c.h.b16 %v431
    %v788 = vunpack.c.l.b16 %v432
    %v789 = vunpack.c.h.b16 %v432
    %v790 = vunpack.c.l.b16 %v433
    %v791 = vunpack.c.h.b16 %v433
    %v792 = vunpack.c.l.b16 %v434
    %v793 = vunpack.c.h.b16 %v434
    %v794 = vunpack.c.l.b16 %v435
    %v795 = vunpack.c.h.b16 %v435
    %v796 = vunpack.c.l.b16 %v436
    %v797 = vunpack.c.h.b16 %v436
    %v798 = vunpack.c.l.b16 %v437
    %v799 = vunpack.c.h.b16 %v437
    %v800 = vunpack.c.l.b16 %v438
    %v801 = vunpack.c.h.b16 %v438
    %v802 = vunpack.c.l.b16 %v439
    %v803 = vunpack.c.h.b16 %v439
    %v804 = vunpack.c.l.b16 %v440
    %v805 = vunpack.c.h.b16 %v440
    %v806 = vunpack.c.l.b16 %v441
    %v807 = vunpack.c.h.b16 %v441
    %v808 = vunpack.c.l.b16 %v442
    %v809 = vunpack.c.h.b16 %v442
    %v810 = vunpack.c.l.b16 %v443
    %v811 = vunpack.c.h.b16 %v443
    %v812 = vunpack.c.l.b16 %v444
    %v813 = vunpack.c.h.b16 %v444
    %v814 = vunpack.c.l.b16 %v445
    %v815 = vunpack.c.h.b16 %v445
    %v816 = vunpack.c.l.b16 %v446
    %v817 = vunpack.c.h.b16 %v446
    %v818 = vunpack.c.l.b16 %v447
    %v819 = vunpack.c.h.b16 %v447
    %v820 = vunpack.c.l.b16 %v448
    %v821 = vunpack.c.h.b16 %v448
    %v822 = vunpack.c.l.b16 %v449
    %v823 = vunpack.c.h.b16 %v449
    %v824 = vunpack.c.l.b16 %v450
    %v825 = vunpack.c.h.b16 %v450
    %v826 = vunpack.c.l.b16 %v451
    %v827 = vunpack.c.h.b16 %v451
    %v828 = vunpack.c.l.b16 %v452
    %v829 = vunpack.c.h.b16 %v452
    %v830 = vunpack.c.l.b16 %v453
    %v831 = vunpack.c.h.b16 %v453
    %v832 = vunpack.c.l.b16 %v454
    %v833 = vunpack.c.h.b16 %v454
    %v834 = vunpack.c.l.b16 %v455
    %v835 = vunpack.c.h.b16 %v455
    %v836 = vunpack.c.l.b16 %v456
    %v837 = vunpack.c.h.b16 %v456
    %v838 = vunpack.c.l.b16 %v457
    %v839 = vunpack.c.h.b16 %v457
    %v840 = vunpack.c.l.b16 %v458
    %v841 = vunpack.c.h.b16 %v458
    %v842 = vunpack.c.l.b16 %v459
    %v843 = vunpack.c.h.b16 %v459
    %v844 = vunpack.c.l.b16 %v460
    %v845 = vunpack.c.h.b16 %v460
    %v846 = vunpack.c.l.b16 %v461
    %v847 = vunpack.c.h.b16 %v461
    %v848 = vunpack.c.l.b16 %v462
    %v849 = vunpack.c.h.b16 %v462
    %v850 = vunpack.c.l.b16 %v463
    %v851 = vunpack.c.h.b16 %v463
    %v852 = vunpack.c.l.b16 %v464
    %v853 = vunpack.c.h.b16 %v464
    %v854 = vunpack.c.l.b16 %v465
    %v855 = vunpack.c.h.b16 %v465
    %v856 = vunpack.c.l.b16 %v466
    %v857 = vunpack.c.h.b16 %v466
    %v858 = vunpack.c.l.b16 %v467
    %v859 = vunpack.c.h.b16 %v467
    %v860 = vunpack.c.l.b16 %v468
    %v861 = vunpack.c.h.b16 %v468
    %v862 = vunpack.c.l.b16 %v469
    %v863 = vunpack.c.h.b16 %v469
    %v864 = vunpack.c.l.b16 %v470
    %v865 = vunpack.c.h.b16 %v470
    %v866 = vunpack.c.l.b16 %v471
    %v867 = vunpack.c.h.b16 %v471
    %v868 = vunpack.c.l.b16 %v472
    %v869 = vunpack.c.h.b16 %v472
    %v870 = vunpack.c.l.b16 %v473
    %v871 = vunpack.c.h.b16 %v473
    %v872 = vunpack.c.l.b16 %v474
    %v873 = vunpack.c.h.b16 %v474
    %v874 = vunpack.c.l.b16 %v475
    %v875 = vunpack.c.h.b16 %v475
    %v876 = vunpack.c.l.b16 %v476
    %v877 = vunpack.c.h.b16 %v476
    %v878 = vunpack.c.l.b16 %v477
    %v879 = vunpack.c.h.b16 %v477
    %v880 = vunpack.c.l.b16 %v478
    %v881 = vunpack.c.h.b16 %v478
    %v882 = vunpack.c.l.b16 %v479
    %v883 = vunpack.c.h.b16 %v479
    %v884 = vunpack.c.l.b16 %v480
    %v885 = vunpack.c.h.b16 %v480
    %v886 = vunpack.c.l.b16 %v481
    %v887 = vunpack.c.h.b16 %v481
    %v888 = vpack.c.b16 %v636, %v632
    %v889 = vpack.c.b16 %v637, %v633
    %v890 = vpack.c.b16 %v638, %v634
    %v891 = vpack.c.b16 %v639, %v635
    %v892 = vpack.c.b16 %v644, %v640
    %v893 = vpack.c.b16 %v645, %v641
    %v894 = vpack.c.b16 %v646, %v642
    %v895 = vpack.c.b16 %v647, %v643
    %v896 = vpack.c.b16 %v652, %v648
    %v897 = vpack.c.b16 %v653, %v649
    %v898 = vpack.c.b16 %v654, %v650
    %v899 = vpack.c.b16 %v655, %v651
    %v900 = vpack.c.b16 %v660, %v656
    %v901 = vpack.c.b16 %v661, %v657
    %v902 = vpack.c.b16 %v662, %v658
    %v903 = vpack.c.b16 %v663, %v659
    %v904 = vpack.c.b16 %v668, %v664
    %v905 = vpack.c.b16 %v669, %v665
    %v906 = vpack.c.b16 %v670, %v666
    %v907 = vpack.c.b16 %v671, %v667
    %v908 = vpack.c.b16 %v676, %v672
    %v909 = vpack.c.b16 %v677, %v673
    %v910 = vpack.c.b16 %v678, %v674
    %v911 = vpack.c.b16 %v679, %v675
    %v912 = vpack.c.b16 %v684, %v680
    %v913 = vpack.c.b16 %v685, %v681
    %v914 = vpack.c.b16 %v686, %v682
    %v915 = vpack.c.b16 %v687, %v683
    %v916 = vpack.c.b16 %v692, %v688
    %v917 = vpack.c.b16 %v693, %v689
    %v918 = vpack.c.b16 %v694, %v690
    %v919 = vpack.c.b16 %v695, %v691
    %v920 = vpack.c.b16 %v700, %v696
    %v921 = vpack.c.b16 %v701, %v697
    %v922 = vpack.c.b16 %v702, %v698
    %v923 = vpack.c.b16 %v703, %v699
    %v924 = vpack.c.b16 %v708, %v704
    %v925 = vpack.c.b16 %v709, %v705
    %v926 = vpack.c.b16 %v710, %v706
    %v927 = vpack.c.b16 %v711, %v707
    %v928 = vpack.c.b16 %v716, %v712
    %v929 = vpack.c.b16 %v717, %v713
    %v930 = vpack.c.b16 %v718, %v714
    %v931 = vpack.c.b16 %v719, %v715
    %v932 = vpack.c.b16 %v724, %v720
    %v933 = vpack.c.b16 %v725, %v721
    %v934 = vpack.c.b16 %v726, %v722
    %v935 = vpack.c.b16 %v727, %v723
    %v936 = vpack.c.b16 %v732, %v728
    %v937 = vpack.c.b16 %v733, %v729
    %v938 = vpack.c.b16 %v734, %v730
    %v939 = vpack.c.b16 %v735, %v731
    %v940 = vpack.c.b16 %v740, %v736
    %v941 = vpack.c.b16 %v741, %v737
    %v942 = vpack.c.b16 %v742, %v738
    %v943 = vpack.c.b16 %v743, %v739
    %v944 = vpack.c.b16 %v748, %v744
    %v945 = vpack.c.b16 %v749, %v745
    %v946 = vpack.c.b16 %v750, %v746
    %v947 = vpack.c.b16 %v751, %v747
    %v948 = vpack.c.b16 %v756, %v752
    %v949 = vpack.c.b16 %v757, %v753
    %v950 = vpack.c.b16 %v758, %v754
    %v951 = vpack.c.b16 %v759, %v755
    %v952 = vpack.c.b16 %v764, %v760
    %v953 = vpack.c.b16 %v765, %v761
    %v954 = vpack.c.b16 %v766, %v762
    %v955 = vpack.c.b16 %v767, %v763
    %v956 = vpack.c.b16 %v772, %v768
    %v957 = vpack.c.b16 %v773, %v769
    %v958 = vpack.c.b16 %v774, %v770
    %v959 = vpack.c.b16 %v775, %v771
    %v960 = vpack.c.b16 %v780, %v776
    %v961 = vpack.c.b16 %v781, %v777
    %v962 = vpack.c.b16 %v782, %v778
    %v963 = vpack.c.b16 %v783, %v779
    %v964 = vpack.c.b16 %v788, %v784
    %v965 = vpack.c.b16 %v789, %v785
    %v966 = vpack.c.b16 %v790, %v786
    %v967 = vpack.c.b16 %v791, %v787
    %v968 = vpack.c.b16 %v796, %v792
    %v969 = vpack.c.b16 %v797, %v793
    %v970 = vpack.c.b16 %v798, %v794
    %v971 = vpack.c.b16 %v799, %v795
    %v972 = vpack.c.b16 %v804, %v800
    %v973 = vpack.c.b16 %v805, %v801
    %v974 = vpack.c.b16 %v806, %v802
    %v975 = vpack.c.b16 %v807, %v803
    %v976 = vpack.c.b16 %v812, %v808
    %v977 = vpack.c.b16 %v813, %v809
    %v978 = vpack.c.b16 %v814, %v810
    %v979 = vpack.c.b16 %v815, %v811
    %v980 = vpack.c.b16 %v820, %v816
    %v981 = vpack.c.b16 %v821, %v817
    %v982 = vpack.c.b16 %v822, %v818
    %v983 = vpack.c.b16 %v823, %v819
    %v984 = vpack.c.b16 %v828, %v824
    %v985 = vpack.c.b16 %v829, %v825
    %v986 = vpack.c.b16 %v830, %v826
    %v987 = vpack.c.b16 %v831, %v827
    %v988 = vpack.c.b16 %v836, %v832
    %v989 = vpack.c.b16 %v837, %v833
    %v990 = vpack.c.b16 %v838, %v834
    %v991 = vpack.c.b16 %v839, %v835
    %v992 = vpack.c.b16 %v844, %v840
    %v993 = vpack.c.b16 %v845, %v841
    %v994 = vpack.c.b16 %v846, %v842
    %v995 = vpack.c.b16 %v847, %v843
    %v996 = vpack.c.b16 %v852, %v848
    %v997 = vpack.c.b16 %v853, %v849
    %v998 = vpack.c.b16 %v854, %v850
    %v999 = vpack.c.b16 %v855, %v851
    %v1000 = vpack.c.b16 %v860, %v856
    %v1001 = vpack.c.b16 %v861, %v857
    %v1002 = vpack.c.b16 %v862, %v858
    %v1003 = vpack.c.b16 %v863, %v859
    %v1004 = vpack.c.b16 %v868, %v864
    %v1005 = vpack.c.b16 %v869, %v865
    %v1006 = vpack.c.b16 %v870, %v866
    %v1007 = vpack.c.b16 %v871, %v867
    %v1008 = vpack.c.b16 %v876, %v872
    %v1009 = vpack.c.b16 %v877, %v873
    %v1010 = vpack.c.b16 %v878, %v874
    %v1011 = vpack.c.b16 %v879, %v875
    %v1012 = vpack.c.b16 %v884, %v880
    %v1013 = vpack.c.b16 %v885, %v881
    %v1014 = vpack.c.b16 %v886, %v882
    %v1015 = vpack.c.b16 %v887, %v883
    %1144 = vmatprep.subr.bf16.mxu0 %v889
    %1145 = vmatpush1.bf16.msra.mxu0 %v888
    %1146 = vmatprep.subr.bf16.mxu0 %v893
    %1147 = vmatpush1.bf16.msra.mxu0 %v892
    %1148 = vmatprep.subr.bf16.mxu0 %v897
    %1149 = vmatpush1.bf16.msra.mxu0 %v896
    %1150 = vmatprep.subr.bf16.mxu0 %v901
    %1151 = vmatpush1.bf16.msra.mxu0 %v900
    %1152 = vmatprep.subr.bf16.mxu0 %v905
    %1153 = vmatpush1.bf16.msra.mxu0 %v904
    %1154 = vmatprep.subr.bf16.mxu0 %v909
    %1155 = vmatpush1.bf16.msra.mxu0 %v908
    %1156 = vmatprep.subr.bf16.mxu0 %v913
    %1157 = vmatpush1.bf16.msra.mxu0 %v912
    %1158 = vmatprep.subr.bf16.mxu0 %v917
    %1159 = vmatpush1.bf16.msra.mxu0 %v916
    %1160 = vmatprep.subr.bf16.mxu0 %v921
    %1161 = vmatpush1.bf16.msra.mxu0 %v920
    %1162 = vmatprep.subr.bf16.mxu0 %v925
    %1163 = vmatpush1.bf16.msra.mxu0 %v924
    %1164 = vmatprep.subr.bf16.mxu0 %v929
    %1165 = vmatpush1.bf16.msra.mxu0 %v928
    %1166 = vmatprep.subr.bf16.mxu0 %v933
    %1167 = vmatpush1.bf16.msra.mxu0 %v932
    %1168 = vmatprep.subr.bf16.mxu0 %v937
    %1169 = vmatpush1.bf16.msra.mxu0 %v936
    %1170 = vmatprep.subr.bf16.mxu0 %v941
    %1171 = vmatpush1.bf16.msra.mxu0 %v940
    %1172 = vmatprep.subr.bf16.mxu0 %v945
    %1173 = vmatpush1.bf16.msra.mxu0 %v944
    %1174 = vmatprep.subr.bf16.mxu0 %v949
    %1175 = vmatpush1.bf16.msra.mxu0 %v948
    %1176 = vmatprep.mubr.bf16.mxu0 %v351
    %1177 = vmatmul.mubr.bf16.gmra.mrb[0].mxu0 %v350
    %v1178 = vpop.f32.mrb[0].mxu0
    %v1179 = vadd.f32 %v487, %v1178
    %v1180 = vpop.f32.mrb[0].mxu0
    %v1181 = vadd.f32 %v491, %v1180
    %v1182 = vpop.f32.mrb[0].mxu0
    %v1183 = vpop.f32.mrb[0].mxu0
    %1184 = vdwg.mxu0
    %1185 = vmatprep.subr.bf16.mxu0 %v953
    %1186 = vmatpush1.bf16.msra.mxu0 %v952
    %1187 = vmatprep.subr.bf16.mxu0 %v957
    %1188 = vmatpush1.bf16.msra.mxu0 %v956
    %1189 = vmatprep.subr.bf16.mxu0 %v961
    %1190 = vmatpush1.bf16.msra.mxu0 %v960
    %1191 = vmatprep.subr.bf16.mxu0 %v965
    %1192 = vmatpush1.bf16.msra.mxu0 %v964
    %1193 = vmatprep.subr.bf16.mxu0 %v969
    %1194 = vmatpush1.bf16.msra.mxu0 %v968
    %1195 = vmatprep.subr.bf16.mxu0 %v973
    %1196 = vmatpush1.bf16.msra.mxu0 %v972
    %1197 = vmatprep.subr.bf16.mxu0 %v977
    %1198 = vmatpush1.bf16.msra.mxu0 %v976
    %1199 = vmatprep.subr.bf16.mxu0 %v981
    %1200 = vmatpush1.bf16.msra.mxu0 %v980
    %1201 = vmatprep.subr.bf16.mxu0 %v985
    %1202 = vmatpush1.bf16.msra.mxu0 %v984
    %1203 = vmatprep.subr.bf16.mxu0 %v989
    %1204 = vmatpush1.bf16.msra.mxu0 %v988
    %1205 = vmatprep.subr.bf16.mxu0 %v993
    %1206 = vmatpush1.bf16.msra.mxu0 %v992
    %1207 = vmatprep.subr.bf16.mxu0 %v997
    %1208 = vmatpush1.bf16.msra.mxu0 %v996
    %1209 = vmatprep.subr.bf16.mxu0 %v1001
    %1210 = vmatpush1.bf16.msra.mxu0 %v1000
    %1211 = vmatprep.subr.bf16.mxu0 %v1005
    %1212 = vmatpush1.bf16.msra.mxu0 %v1004
    %1213 = vmatprep.subr.bf16.mxu0 %v1009
    %1214 = vmatpush1.bf16.msra.mxu0 %v1008
    %1215 = vmatprep.subr.bf16.mxu0 %v1013
    %1216 = vmatpush1.bf16.msra.mxu0 %v1012
    %1217 = vmatprep.mubr.bf16.mxu0 %v353
    %1218 = vmatmul.mubr.bf16.gmra.mrb[0].mxu0 %v352
    %v1219 = vpop.f32.mrb[0].mxu0
    %v1220 = vadd.f32 %v1179, %v1219
    %v1221 = vpop.f32.mrb[0].mxu0
    %v1222 = vadd.f32 %v1181, %v1221
    %v1223 = vpop.f32.mrb[0].mxu0
    %v1224 = vpop.f32.mrb[0].mxu0
    %1225 = vdwg.mxu0
    %1226 = vmatprep.subr.bf16.mxu0 %v891
    %1227 = vmatpush1.bf16.msra.mxu0 %v890
    %1228 = vmatprep.subr.bf16.mxu0 %v895
    %1229 = vmatpush1.bf16.msra.mxu0 %v894
    %1230 = vmatprep.subr.bf16.mxu0 %v899
    %1231 = vmatpush1.bf16.msra.mxu0 %v898
    %1232 = vmatprep.subr.bf16.mxu0 %v903
    %1233 = vmatpush1.bf16.msra.mxu0 %v902
    %1234 = vmatprep.subr.bf16.mxu0 %v907
    %1235 = vmatpush1.bf16.msra.mxu0 %v906
    %1236 = vmatprep.subr.bf16.mxu0 %v911
    %1237 = vmatpush1.bf16.msra.mxu0 %v910
    %1238 = vmatprep.subr.bf16.mxu0 %v915
    %1239 = vmatpush1.bf16.msra.mxu0 %v914
    %1240 = vmatprep.subr.bf16.mxu0 %v919
    %1241 = vmatpush1.bf16.msra.mxu0 %v918
    %1242 = vmatprep.subr.bf16.mxu0 %v923
    %1243 = vmatpush1.bf16.msra.mxu0 %v922
    %1244 = vmatprep.subr.bf16.mxu0 %v927
    %1245 = vmatpush1.bf16.msra.mxu0 %v926
    %1246 = vmatprep.subr.bf16.mxu0 %v931
    %1247 = vmatpush1.bf16.msra.mxu0 %v930
    %1248 = vmatprep.subr.bf16.mxu0 %v935
    %1249 = vmatpush1.bf16.msra.mxu0 %v934
    %1250 = vmatprep.subr.bf16.mxu0 %v939
    %1251 = vmatpush1.bf16.msra.mxu0 %v938
    %1252 = vmatprep.subr.bf16.mxu0 %v943
    %1253 = vmatpush1.bf16.msra.mxu0 %v942
    %1254 = vmatprep.subr.bf16.mxu0 %v947
    %1255 = vmatpush1.bf16.msra.mxu0 %v946
    %1256 = vmatprep.subr.bf16.mxu0 %v951
    %1257 = vmatpush1.bf16.msra.mxu0 %v950
    %1258 = vmatprep.mubr.bf16.mxu0 %v351
    %1259 = vmatmul.mubr.bf16.gmra.mrb[0].mxu0 %v350
    %v1260 = vpop.f32.mrb[0].mxu0
    %v1261 = vadd.f32 %v495, %v1260
    %v1262 = vpop.f32.mrb[0].mxu0
    %v1263 = vadd.f32 %v499, %v1262
    %v1264 = vpop.f32.mrb[0].mxu0
    %v1265 = vpop.f32.mrb[0].mxu0
    %1266 = vdwg.mxu0
    %1267 = vmatprep.subr.bf16.mxu0 %v955
    %1268 = vmatpush1.bf16.msra.mxu0 %v954
    %1269 = vmatprep.subr.bf16.mxu0 %v959
    %1270 = vmatpush1.bf16.msra.mxu0 %v958
    %1271 = vmatprep.subr.bf16.mxu0 %v963
    %1272 = vmatpush1.bf16.msra.mxu0 %v962
    %1273 = vmatprep.subr.bf16.mxu0 %v967
    %1274 = vmatpush1.bf16.msra.mxu0 %v966
    %1275 = vmatprep.subr.bf16.mxu0 %v971
    %1276 = vmatpush1.bf16.msra.mxu0 %v970
    %1277 = vmatprep.subr.bf16.mxu0 %v975
    %1278 = vmatpush1.bf16.msra.mxu0 %v974
    %1279 = vmatprep.subr.bf16.mxu0 %v979
    %1280 = vmatpush1.bf16.msra.mxu0 %v978
    %1281 = vmatprep.subr.bf16.mxu0 %v983
    %1282 = vmatpush1.bf16.msra.mxu0 %v982
    %1283 = vmatprep.subr.bf16.mxu0 %v987
    %1284 = vmatpush1.bf16.msra.mxu0 %v986
    %1285 = vmatprep.subr.bf16.mxu0 %v991
    %1286 = vmatpush1.bf16.msra.mxu0 %v990
    %1287 = vmatprep.subr.bf16.mxu0 %v995
    %1288 = vmatpush1.bf16.msra.mxu0 %v994
    %1289 = vmatprep.subr.bf16.mxu0 %v999
    %1290 = vmatpush1.bf16.msra.mxu0 %v998
    %1291 = vmatprep.subr.bf16.mxu0 %v1003
    %1292 = vmatpush1.bf16.msra.mxu0 %v1002
    %1293 = vmatprep.subr.bf16.mxu0 %v1007
    %1294 = vmatpush1.bf16.msra.mxu0 %v1006
    %1295 = vmatprep.subr.bf16.mxu0 %v1011
    %1296 = vmatpush1.bf16.msra.mxu0 %v1010
    %1297 = vmatprep.subr.bf16.mxu0 %v1015
    %1298 = vmatpush1.bf16.msra.mxu0 %v1014
    %1299 = vmatprep.mubr.bf16.mxu0 %v353
    %1300 = vmatmul.mubr.bf16.gmra.mrb[0].mxu0 %v352
    %v1301 = vpop.f32.mrb[0].mxu0
    %v1302 = vadd.f32 %v1261, %v1301
    %v1303 = vpop.f32.mrb[0].mxu0
    %v1304 = vadd.f32 %v1263, %v1303
    %v1305 = vpop.f32.mrb[0].mxu0
    %v1306 = vpop.f32.mrb[0].mxu0
    %1307 = vdwg.mxu0
    %v1308 = vmax.f32 %v1220, 0.0
    %v1309 = vmax.f32 %v1222, 0.0
    %v1310 = vmax.f32 %v1302, 0.0
    %v1311 = vmax.f32 %v1304, 0.0
    %v1312 = vpack.c.bf16 %v1308, %v1308
    %v1313 = vpack.c.bf16 %v1309, %v1309
    %v1314 = vpack.c.bf16 %v1310, %v1310
    %v1315 = vpack.c.bf16 %v1311, %v1311
    %v1316 = vld [vmem:[#allocation7] sm:$0xff]
    %v1317 = vld [vmem:[#allocation7 + $0x8] sm:$0xff]
    %v1318 = vld [vmem:[#allocation7 + $0x10] sm:$0xff]
    %v1319 = vld [vmem:[#allocation7 + $0x18] sm:$0xff]
    %v1320 = vld [vmem:[#allocation7 + $0x20] sm:$0xff]
    %v1321 = vld [vmem:[#allocation7 + $0x28] sm:$0xff]
    %v1322 = vld [vmem:[#allocation7 + $0x30] sm:$0xff]
    %v1323 = vld [vmem:[#allocation7 + $0x38] sm:$0xff]
    %v1324 = vld [vmem:[#allocation7 + $0x40] sm:$0xff]
    %v1325 = vld [vmem:[#allocation7 + $0x48] sm:$0xff]
    %v1326 = vld [vmem:[#allocation7 + $0x50] sm:$0xff]
    %v1327 = vld [vmem:[#allocation7 + $0x58] sm:$0xff]
    %v1328 = vld [vmem:[#allocation7 + $0x60] sm:$0xff]
    %v1329 = vld [vmem:[#allocation7 + $0x68] sm:$0xff]
    %v1330 = vld [vmem:[#allocation7 + $0x70] sm:$0xff]
    %v1331 = vld [vmem:[#allocation7 + $0x78] sm:$0xff]
    %v1332 = vld [vmem:[#allocation7 + $0x80] sm:$0xff]
    %v1333 = vld [vmem:[#allocation7 + $0x88] sm:$0xff]
    %v1334 = vld [vmem:[#allocation7 + $0x90] sm:$0xff]
    %v1335 = vld [vmem:[#allocation7 + $0x98] sm:$0xff]
    %v1336 = vld [vmem:[#allocation7 + $0xa0] sm:$0xff]
    %v1337 = vld [vmem:[#allocation7 + $0xa8] sm:$0xff]
    %v1338 = vld [vmem:[#allocation7 + $0xb0] sm:$0xff]
    %v1339 = vld [vmem:[#allocation7 + $0xb8] sm:$0xff]
    %v1340 = vld [vmem:[#allocation7 + $0xc0] sm:$0xff]
    %v1341 = vld [vmem:[#allocation7 + $0xc8] sm:$0xff]
    %v1342 = vld [vmem:[#allocation7 + $0xd0] sm:$0xff]
    %v1343 = vld [vmem:[#allocation7 + $0xd8] sm:$0xff]
    %v1344 = vld [vmem:[#allocation7 + $0xe0] sm:$0xff]
    %v1345 = vld [vmem:[#allocation7 + $0xe8] sm:$0xff]
    %v1346 = vld [vmem:[#allocation7 + $0xf0] sm:$0xff]
    %v1347 = vld [vmem:[#allocation7 + $0xf8] sm:$0xff]
    %v1348 = vld [vmem:[#allocation7 + $0x100] sm:$0xff]
    %v1349 = vld [vmem:[#allocation7 + $0x108] sm:$0xff]
    %v1350 = vld [vmem:[#allocation7 + $0x110] sm:$0xff]
    %v1351 = vld [vmem:[#allocation7 + $0x118] sm:$0xff]
    %v1352 = vld [vmem:[#allocation7 + $0x120] sm:$0xff]
    %v1353 = vld [vmem:[#allocation7 + $0x128] sm:$0xff]
    %v1354 = vld [vmem:[#allocation7 + $0x130] sm:$0xff]
    %v1355 = vld [vmem:[#allocation7 + $0x138] sm:$0xff]
    %v1356 = vld [vmem:[#allocation7 + $0x140] sm:$0xff]
    %v1357 = vld [vmem:[#allocation7 + $0x148] sm:$0xff]
    %v1358 = vld [vmem:[#allocation7 + $0x150] sm:$0xff]
    %v1359 = vld [vmem:[#allocation7 + $0x158] sm:$0xff]
    %v1360 = vld [vmem:[#allocation7 + $0x160] sm:$0xff]
    %v1361 = vld [vmem:[#allocation7 + $0x168] sm:$0xff]
    %v1362 = vld [vmem:[#allocation7 + $0x170] sm:$0xff]
    %v1363 = vld [vmem:[#allocation7 + $0x178] sm:$0xff]
    %v1364 = vld [vmem:[#allocation7 + $0x180] sm:$0xff]
    %v1365 = vld [vmem:[#allocation7 + $0x188] sm:$0xff]
    %v1366 = vld [vmem:[#allocation7 + $0x190] sm:$0xff]
    %v1367 = vld [vmem:[#allocation7 + $0x198] sm:$0xff]
    %v1368 = vld [vmem:[#allocation7 + $0x1a0] sm:$0xff]
    %v1369 = vld [vmem:[#allocation7 + $0x1a8] sm:$0xff]
    %v1370 = vld [vmem:[#allocation7 + $0x1b0] sm:$0xff]
    %v1371 = vld [vmem:[#allocation7 + $0x1b8] sm:$0xff]
    %v1372 = vld [vmem:[#allocation7 + $0x1c0] sm:$0xff]
    %v1373 = vld [vmem:[#allocation7 + $0x1c8] sm:$0xff]
    %v1374 = vld [vmem:[#allocation7 + $0x1d0] sm:$0xff]
    %v1375 = vld [vmem:[#allocation7 + $0x1d8] sm:$0xff]
    %v1376 = vld [vmem:[#allocation7 + $0x1e0] sm:$0xff]
    %v1377 = vld [vmem:[#allocation7 + $0x1e8] sm:$0xff]
    %v1378 = vld [vmem:[#allocation7 + $0x1f0] sm:$0xff]
    %v1379 = vld [vmem:[#allocation7 + $0x1f8] sm:$0xff]
    %v1380 = vld [vmem:[#allocation7 + $0x200] sm:$0xff]
    %v1381 = vld [vmem:[#allocation7 + $0x208] sm:$0xff]
    %v1382 = vld [vmem:[#allocation7 + $0x210] sm:$0xff]
    %v1383 = vld [vmem:[#allocation7 + $0x218] sm:$0xff]
    %v1384 = vld [vmem:[#allocation7 + $0x220] sm:$0xff]
    %v1385 = vld [vmem:[#allocation7 + $0x228] sm:$0xff]
    %v1386 = vld [vmem:[#allocation7 + $0x230] sm:$0xff]
    %v1387 = vld [vmem:[#allocation7 + $0x238] sm:$0xff]
    %v1388 = vld [vmem:[#allocation7 + $0x240] sm:$0xff]
    %v1389 = vld [vmem:[#allocation7 + $0x248] sm:$0xff]
    %v1390 = vld [vmem:[#allocation7 + $0x250] sm:$0xff]
    %v1391 = vld [vmem:[#allocation7 + $0x258] sm:$0xff]
    %v1392 = vld [vmem:[#allocation7 + $0x260] sm:$0xff]
    %v1393 = vld [vmem:[#allocation7 + $0x268] sm:$0xff]
    %v1394 = vld [vmem:[#allocation7 + $0x270] sm:$0xff]
    %v1395 = vld [vmem:[#allocation7 + $0x278] sm:$0xff]
    %v1396 = vld [vmem:[#allocation7 + $0x280] sm:$0xff]
    %v1397 = vld [vmem:[#allocation7 + $0x288] sm:$0xff]
    %v1398 = vld [vmem:[#allocation7 + $0x290] sm:$0xff]
    %v1399 = vld [vmem:[#allocation7 + $0x298] sm:$0xff]
    %v1400 = vld [vmem:[#allocation7 + $0x2a0] sm:$0xff]
    %v1401 = vld [vmem:[#allocation7 + $0x2a8] sm:$0xff]
    %v1402 = vld [vmem:[#allocation7 + $0x2b0] sm:$0xff]
    %v1403 = vld [vmem:[#allocation7 + $0x2b8] sm:$0xff]
    %v1404 = vld [vmem:[#allocation7 + $0x2c0] sm:$0xff]
    %v1405 = vld [vmem:[#allocation7 + $0x2c8] sm:$0xff]
    %v1406 = vld [vmem:[#allocation7 + $0x2d0] sm:$0xff]
    %v1407 = vld [vmem:[#allocation7 + $0x2d8] sm:$0xff]
    %v1408 = vld [vmem:[#allocation7 + $0x2e0] sm:$0xff]
    %v1409 = vld [vmem:[#allocation7 + $0x2e8] sm:$0xff]
    %v1410 = vld [vmem:[#allocation7 + $0x2f0] sm:$0xff]
    %v1411 = vld [vmem:[#allocation7 + $0x2f8] sm:$0xff]
    %v1412 = vld [vmem:[#allocation7 + $0x300] sm:$0xff]
    %v1413 = vld [vmem:[#allocation7 + $0x308] sm:$0xff]
    %v1414 = vld [vmem:[#allocation7 + $0x310] sm:$0xff]
    %v1415 = vld [vmem:[#allocation7 + $0x318] sm:$0xff]
    %v1416 = vld [vmem:[#allocation7 + $0x320] sm:$0xff]
    %v1417 = vld [vmem:[#allocation7 + $0x328] sm:$0xff]
    %v1418 = vld [vmem:[#allocation7 + $0x330] sm:$0xff]
    %v1419 = vld [vmem:[#allocation7 + $0x338] sm:$0xff]
    %v1420 = vld [vmem:[#allocation7 + $0x340] sm:$0xff]
    %v1421 = vld [vmem:[#allocation7 + $0x348] sm:$0xff]
    %v1422 = vld [vmem:[#allocation7 + $0x350] sm:$0xff]
    %v1423 = vld [vmem:[#allocation7 + $0x358] sm:$0xff]
    %v1424 = vld [vmem:[#allocation7 + $0x360] sm:$0xff]
    %v1425 = vld [vmem:[#allocation7 + $0x368] sm:$0xff]
    %v1426 = vld [vmem:[#allocation7 + $0x370] sm:$0xff]
    %v1427 = vld [vmem:[#allocation7 + $0x378] sm:$0xff]
    %v1428 = vld [vmem:[#allocation7 + $0x380] sm:$0xff]
    %v1429 = vld [vmem:[#allocation7 + $0x388] sm:$0xff]
    %v1430 = vld [vmem:[#allocation7 + $0x390] sm:$0xff]
    %v1431 = vld [vmem:[#allocation7 + $0x398] sm:$0xff]
    %v1432 = vld [vmem:[#allocation7 + $0x3a0] sm:$0xff]
    %v1433 = vld [vmem:[#allocation7 + $0x3a8] sm:$0xff]
    %v1434 = vld [vmem:[#allocation7 + $0x3b0] sm:$0xff]
    %v1435 = vld [vmem:[#allocation7 + $0x3b8] sm:$0xff]
    %v1436 = vld [vmem:[#allocation7 + $0x3c0] sm:$0xff]
    %v1437 = vld [vmem:[#allocation7 + $0x3c8] sm:$0xff]
    %v1438 = vld [vmem:[#allocation7 + $0x3d0] sm:$0xff]
    %v1439 = vld [vmem:[#allocation7 + $0x3d8] sm:$0xff]
    %v1440 = vld [vmem:[#allocation7 + $0x3e0] sm:$0xff]
    %v1441 = vld [vmem:[#allocation7 + $0x3e8] sm:$0xff]
    %v1442 = vld [vmem:[#allocation7 + $0x3f0] sm:$0xff]
    %v1443 = vld [vmem:[#allocation7 + $0x3f8] sm:$0xff]
    %v1444 = vld [vmem:[%s8] sm:$0xf]
    %v1446 = vlaneseq
    %v1447 = vshrl.u32 %v1446, 7
    %v1448 = vsub.s32 0, %v1447
    %v1449 = vrot.slane %v1444, %v1448
    %v1450 = vlaneseq
    %v1451 = vshrl.u32 %v1450, 7
    %v1452 = vsub.s32 1, %v1451
    %v1453 = vrot.slane %v1444, %v1452
    %v1454 = vlaneseq
    %v1455 = vshrl.u32 %v1454, 7
    %v1456 = vsub.s32 2, %v1455
    %v1457 = vrot.slane %v1444, %v1456
    %v1458 = vlaneseq
    %v1459 = vshrl.u32 %v1458, 7
    %v1460 = vsub.s32 3, %v1459
    %v1461 = vrot.slane %v1444, %v1460
    %v1594 = vunpack.c.l.b16 %v1316
    %v1595 = vunpack.c.h.b16 %v1316
    %v1596 = vunpack.c.l.b16 %v1317
    %v1597 = vunpack.c.h.b16 %v1317
    %v1598 = vunpack.c.l.b16 %v1318
    %v1599 = vunpack.c.h.b16 %v1318
    %v1600 = vunpack.c.l.b16 %v1319
    %v1601 = vunpack.c.h.b16 %v1319
    %v1602 = vunpack.c.l.b16 %v1320
    %v1603 = vunpack.c.h.b16 %v1320
    %v1604 = vunpack.c.l.b16 %v1321
    %v1605 = vunpack.c.h.b16 %v1321
    %v1606 = vunpack.c.l.b16 %v1322
    %v1607 = vunpack.c.h.b16 %v1322
    %v1608 = vunpack.c.l.b16 %v1323
    %v1609 = vunpack.c.h.b16 %v1323
    %v1610 = vunpack.c.l.b16 %v1324
    %v1611 = vunpack.c.h.b16 %v1324
    %v1612 = vunpack.c.l.b16 %v1325
    %v1613 = vunpack.c.h.b16 %v1325
    %v1614 = vunpack.c.l.b16 %v1326
    %v1615 = vunpack.c.h.b16 %v1326
    %v1616 = vunpack.c.l.b16 %v1327
    %v1617 = vunpack.c.h.b16 %v1327
    %v1618 = vunpack.c.l.b16 %v1328
    %v1619 = vunpack.c.h.b16 %v1328
    %v1620 = vunpack.c.l.b16 %v1329
    %v1621 = vunpack.c.h.b16 %v1329
    %v1622 = vunpack.c.l.b16 %v1330
    %v1623 = vunpack.c.h.b16 %v1330
    %v1624 = vunpack.c.l.b16 %v1331
    %v1625 = vunpack.c.h.b16 %v1331
    %v1626 = vunpack.c.l.b16 %v1332
    %v1627 = vunpack.c.h.b16 %v1332
    %v1628 = vunpack.c.l.b16 %v1333
    %v1629 = vunpack.c.h.b16 %v1333
    %v1630 = vunpack.c.l.b16 %v1334
    %v1631 = vunpack.c.h.b16 %v1334
    %v1632 = vunpack.c.l.b16 %v1335
    %v1633 = vunpack.c.h.b16 %v1335
    %v1634 = vunpack.c.l.b16 %v1336
    %v1635 = vunpack.c.h.b16 %v1336
    %v1636 = vunpack.c.l.b16 %v1337
    %v1637 = vunpack.c.h.b16 %v1337
    %v1638 = vunpack.c.l.b16 %v1338
    %v1639 = vunpack.c.h.b16 %v1338
    %v1640 = vunpack.c.l.b16 %v1339
    %v1641 = vunpack.c.h.b16 %v1339
    %v1642 = vunpack.c.l.b16 %v1340
    %v1643 = vunpack.c.h.b16 %v1340
    %v1644 = vunpack.c.l.b16 %v1341
    %v1645 = vunpack.c.h.b16 %v1341
    %v1646 = vunpack.c.l.b16 %v1342
    %v1647 = vunpack.c.h.b16 %v1342
    %v1648 = vunpack.c.l.b16 %v1343
    %v1649 = vunpack.c.h.b16 %v1343
    %v1650 = vunpack.c.l.b16 %v1344
    %v1651 = vunpack.c.h.b16 %v1344
    %v1652 = vunpack.c.l.b16 %v1345
    %v1653 = vunpack.c.h.b16 %v1345
    %v1654 = vunpack.c.l.b16 %v1346
    %v1655 = vunpack.c.h.b16 %v1346
    %v1656 = vunpack.c.l.b16 %v1347
    %v1657 = vunpack.c.h.b16 %v1347
    %v1658 = vunpack.c.l.b16 %v1348
    %v1659 = vunpack.c.h.b16 %v1348
    %v1660 = vunpack.c.l.b16 %v1349
    %v1661 = vunpack.c.h.b16 %v1349
    %v1662 = vunpack.c.l.b16 %v1350
    %v1663 = vunpack.c.h.b16 %v1350
    %v1664 = vunpack.c.l.b16 %v1351
    %v1665 = vunpack.c.h.b16 %v1351
    %v1666 = vunpack.c.l.b16 %v1352
    %v1667 = vunpack.c.h.b16 %v1352
    %v1668 = vunpack.c.l.b16 %v1353
    %v1669 = vunpack.c.h.b16 %v1353
    %v1670 = vunpack.c.l.b16 %v1354
    %v1671 = vunpack.c.h.b16 %v1354
    %v1672 = vunpack.c.l.b16 %v1355
    %v1673 = vunpack.c.h.b16 %v1355
    %v1674 = vunpack.c.l.b16 %v1356
    %v1675 = vunpack.c.h.b16 %v1356
    %v1676 = vunpack.c.l.b16 %v1357
    %v1677 = vunpack.c.h.b16 %v1357
    %v1678 = vunpack.c.l.b16 %v1358
    %v1679 = vunpack.c.h.b16 %v1358
    %v1680 = vunpack.c.l.b16 %v1359
    %v1681 = vunpack.c.h.b16 %v1359
    %v1682 = vunpack.c.l.b16 %v1360
    %v1683 = vunpack.c.h.b16 %v1360
    %v1684 = vunpack.c.l.b16 %v1361
    %v1685 = vunpack.c.h.b16 %v1361
    %v1686 = vunpack.c.l.b16 %v1362
    %v1687 = vunpack.c.h.b16 %v1362
    %v1688 = vunpack.c.l.b16 %v1363
    %v1689 = vunpack.c.h.b16 %v1363
    %v1690 = vunpack.c.l.b16 %v1364
    %v1691 = vunpack.c.h.b16 %v1364
    %v1692 = vunpack.c.l.b16 %v1365
    %v1693 = vunpack.c.h.b16 %v1365
    %v1694 = vunpack.c.l.b16 %v1366
    %v1695 = vunpack.c.h.b16 %v1366
    %v1696 = vunpack.c.l.b16 %v1367
    %v1697 = vunpack.c.h.b16 %v1367
    %v1698 = vunpack.c.l.b16 %v1368
    %v1699 = vunpack.c.h.b16 %v1368
    %v1700 = vunpack.c.l.b16 %v1369
    %v1701 = vunpack.c.h.b16 %v1369
    %v1702 = vunpack.c.l.b16 %v1370
    %v1703 = vunpack.c.h.b16 %v1370
    %v1704 = vunpack.c.l.b16 %v1371
    %v1705 = vunpack.c.h.b16 %v1371
    %v1706 = vunpack.c.l.b16 %v1372
    %v1707 = vunpack.c.h.b16 %v1372
    %v1708 = vunpack.c.l.b16 %v1373
    %v1709 = vunpack.c.h.b16 %v1373
    %v1710 = vunpack.c.l.b16 %v1374
    %v1711 = vunpack.c.h.b16 %v1374
    %v1712 = vunpack.c.l.b16 %v1375
    %v1713 = vunpack.c.h.b16 %v1375
    %v1714 = vunpack.c.l.b16 %v1376
    %v1715 = vunpack.c.h.b16 %v1376
    %v1716 = vunpack.c.l.b16 %v1377
    %v1717 = vunpack.c.h.b16 %v1377
    %v1718 = vunpack.c.l.b16 %v1378
    %v1719 = vunpack.c.h.b16 %v1378
    %v1720 = vunpack.c.l.b16 %v1379
    %v1721 = vunpack.c.h.b16 %v1379
    %v1722 = vunpack.c.l.b16 %v1380
    %v1723 = vunpack.c.h.b16 %v1380
    %v1724 = vunpack.c.l.b16 %v1381
    %v1725 = vunpack.c.h.b16 %v1381
    %v1726 = vunpack.c.l.b16 %v1382
    %v1727 = vunpack.c.h.b16 %v1382
    %v1728 = vunpack.c.l.b16 %v1383
    %v1729 = vunpack.c.h.b16 %v1383
    %v1730 = vunpack.c.l.b16 %v1384
    %v1731 = vunpack.c.h.b16 %v1384
    %v1732 = vunpack.c.l.b16 %v1385
    %v1733 = vunpack.c.h.b16 %v1385
    %v1734 = vunpack.c.l.b16 %v1386
    %v1735 = vunpack.c.h.b16 %v1386
    %v1736 = vunpack.c.l.b16 %v1387
    %v1737 = vunpack.c.h.b16 %v1387
    %v1738 = vunpack.c.l.b16 %v1388
    %v1739 = vunpack.c.h.b16 %v1388
    %v1740 = vunpack.c.l.b16 %v1389
    %v1741 = vunpack.c.h.b16 %v1389
    %v1742 = vunpack.c.l.b16 %v1390
    %v1743 = vunpack.c.h.b16 %v1390
    %v1744 = vunpack.c.l.b16 %v1391
    %v1745 = vunpack.c.h.b16 %v1391
    %v1746 = vunpack.c.l.b16 %v1392
    %v1747 = vunpack.c.h.b16 %v1392
    %v1748 = vunpack.c.l.b16 %v1393
    %v1749 = vunpack.c.h.b16 %v1393
    %v1750 = vunpack.c.l.b16 %v1394
    %v1751 = vunpack.c.h.b16 %v1394
    %v1752 = vunpack.c.l.b16 %v1395
    %v1753 = vunpack.c.h.b16 %v1395
    %v1754 = vunpack.c.l.b16 %v1396
    %v1755 = vunpack.c.h.b16 %v1396
    %v1756 = vunpack.c.l.b16 %v1397
    %v1757 = vunpack.c.h.b16 %v1397
    %v1758 = vunpack.c.l.b16 %v1398
    %v1759 = vunpack.c.h.b16 %v1398
    %v1760 = vunpack.c.l.b16 %v1399
    %v1761 = vunpack.c.h.b16 %v1399
    %v1762 = vunpack.c.l.b16 %v1400
    %v1763 = vunpack.c.h.b16 %v1400
    %v1764 = vunpack.c.l.b16 %v1401
    %v1765 = vunpack.c.h.b16 %v1401
    %v1766 = vunpack.c.l.b16 %v1402
    %v1767 = vunpack.c.h.b16 %v1402
    %v1768 = vunpack.c.l.b16 %v1403
    %v1769 = vunpack.c.h.b16 %v1403
    %v1770 = vunpack.c.l.b16 %v1404
    %v1771 = vunpack.c.h.b16 %v1404
    %v1772 = vunpack.c.l.b16 %v1405
    %v1773 = vunpack.c.h.b16 %v1405
    %v1774 = vunpack.c.l.b16 %v1406
    %v1775 = vunpack.c.h.b16 %v1406
    %v1776 = vunpack.c.l.b16 %v1407
    %v1777 = vunpack.c.h.b16 %v1407
    %v1778 = vunpack.c.l.b16 %v1408
    %v1779 = vunpack.c.h.b16 %v1408
    %v1780 = vunpack.c.l.b16 %v1409
    %v1781 = vunpack.c.h.b16 %v1409
    %v1782 = vunpack.c.l.b16 %v1410
    %v1783 = vunpack.c.h.b16 %v1410
    %v1784 = vunpack.c.l.b16 %v1411
    %v1785 = vunpack.c.h.b16 %v1411
    %v1786 = vunpack.c.l.b16 %v1412
    %v1787 = vunpack.c.h.b16 %v1412
    %v1788 = vunpack.c.l.b16 %v1413
    %v1789 = vunpack.c.h.b16 %v1413
    %v1790 = vunpack.c.l.b16 %v1414
    %v1791 = vunpack.c.h.b16 %v1414
    %v1792 = vunpack.c.l.b16 %v1415
    %v1793 = vunpack.c.h.b16 %v1415
    %v1794 = vunpack.c.l.b16 %v1416
    %v1795 = vunpack.c.h.b16 %v1416
    %v1796 = vunpack.c.l.b16 %v1417
    %v1797 = vunpack.c.h.b16 %v1417
    %v1798 = vunpack.c.l.b16 %v1418
    %v1799 = vunpack.c.h.b16 %v1418
    %v1800 = vunpack.c.l.b16 %v1419
    %v1801 = vunpack.c.h.b16 %v1419
    %v1802 = vunpack.c.l.b16 %v1420
    %v1803 = vunpack.c.h.b16 %v1420
    %v1804 = vunpack.c.l.b16 %v1421
    %v1805 = vunpack.c.h.b16 %v1421
    %v1806 = vunpack.c.l.b16 %v1422
    %v1807 = vunpack.c.h.b16 %v1422
    %v1808 = vunpack.c.l.b16 %v1423
    %v1809 = vunpack.c.h.b16 %v1423
    %v1810 = vunpack.c.l.b16 %v1424
    %v1811 = vunpack.c.h.b16 %v1424
    %v1812 = vunpack.c.l.b16 %v1425
    %v1813 = vunpack.c.h.b16 %v1425
    %v1814 = vunpack.c.l.b16 %v1426
    %v1815 = vunpack.c.h.b16 %v1426
    %v1816 = vunpack.c.l.b16 %v1427
    %v1817 = vunpack.c.h.b16 %v1427
    %v1818 = vunpack.c.l.b16 %v1428
    %v1819 = vunpack.c.h.b16 %v1428
    %v1820 = vunpack.c.l.b16 %v1429
    %v1821 = vunpack.c.h.b16 %v1429
    %v1822 = vunpack.c.l.b16 %v1430
    %v1823 = vunpack.c.h.b16 %v1430
    %v1824 = vunpack.c.l.b16 %v1431
    %v1825 = vunpack.c.h.b16 %v1431
    %v1826 = vunpack.c.l.b16 %v1432
    %v1827 = vunpack.c.h.b16 %v1432
    %v1828 = vunpack.c.l.b16 %v1433
    %v1829 = vunpack.c.h.b16 %v1433
    %v1830 = vunpack.c.l.b16 %v1434
    %v1831 = vunpack.c.h.b16 %v1434
    %v1832 = vunpack.c.l.b16 %v1435
    %v1833 = vunpack.c.h.b16 %v1435
    %v1834 = vunpack.c.l.b16 %v1436
    %v1835 = vunpack.c.h.b16 %v1436
    %v1836 = vunpack.c.l.b16 %v1437
    %v1837 = vunpack.c.h.b16 %v1437
    %v1838 = vunpack.c.l.b16 %v1438
    %v1839 = vunpack.c.h.b16 %v1438
    %v1840 = vunpack.c.l.b16 %v1439
    %v1841 = vunpack.c.h.b16 %v1439
    %v1842 = vunpack.c.l.b16 %v1440
    %v1843 = vunpack.c.h.b16 %v1440
    %v1844 = vunpack.c.l.b16 %v1441
    %v1845 = vunpack.c.h.b16 %v1441
    %v1846 = vunpack.c.l.b16 %v1442
    %v1847 = vunpack.c.h.b16 %v1442
    %v1848 = vunpack.c.l.b16 %v1443
    %v1849 = vunpack.c.h.b16 %v1443
    %v1850 = vpack.c.b16 %v1598, %v1594
    %v1851 = vpack.c.b16 %v1599, %v1595
    %v1852 = vpack.c.b16 %v1600, %v1596
    %v1853 = vpack.c.b16 %v1601, %v1597
    %v1854 = vpack.c.b16 %v1606, %v1602
    %v1855 = vpack.c.b16 %v1607, %v1603
    %v1856 = vpack.c.b16 %v1608, %v1604
    %v1857 = vpack.c.b16 %v1609, %v1605
    %v1858 = vpack.c.b16 %v1614, %v1610
    %v1859 = vpack.c.b16 %v1615, %v1611
    %v1860 = vpack.c.b16 %v1616, %v1612
    %v1861 = vpack.c.b16 %v1617, %v1613
    %v1862 = vpack.c.b16 %v1622, %v1618
    %v1863 = vpack.c.b16 %v1623, %v1619
    %v1864 = vpack.c.b16 %v1624, %v1620
    %v1865 = vpack.c.b16 %v1625, %v1621
    %v1866 = vpack.c.b16 %v1630, %v1626
    %v1867 = vpack.c.b16 %v1631, %v1627
    %v1868 = vpack.c.b16 %v1632, %v1628
    %v1869 = vpack.c.b16 %v1633, %v1629
    %v1870 = vpack.c.b16 %v1638, %v1634
    %v1871 = vpack.c.b16 %v1639, %v1635
    %v1872 = vpack.c.b16 %v1640, %v1636
    %v1873 = vpack.c.b16 %v1641, %v1637
    %v1874 = vpack.c.b16 %v1646, %v1642
    %v1875 = vpack.c.b16 %v1647, %v1643
    %v1876 = vpack.c.b16 %v1648, %v1644
    %v1877 = vpack.c.b16 %v1649, %v1645
    %v1878 = vpack.c.b16 %v1654, %v1650
    %v1879 = vpack.c.b16 %v1655, %v1651
    %v1880 = vpack.c.b16 %v1656, %v1652
    %v1881 = vpack.c.b16 %v1657, %v1653
    %v1882 = vpack.c.b16 %v1662, %v1658
    %v1883 = vpack.c.b16 %v1663, %v1659
    %v1884 = vpack.c.b16 %v1664, %v1660
    %v1885 = vpack.c.b16 %v1665, %v1661
    %v1886 = vpack.c.b16 %v1670, %v1666
    %v1887 = vpack.c.b16 %v1671, %v1667
    %v1888 = vpack.c.b16 %v1672, %v1668
    %v1889 = vpack.c.b16 %v1673, %v1669
    %v1890 = vpack.c.b16 %v1678, %v1674
    %v1891 = vpack.c.b16 %v1679, %v1675
    %v1892 = vpack.c.b16 %v1680, %v1676
    %v1893 = vpack.c.b16 %v1681, %v1677
    %v1894 = vpack.c.b16 %v1686, %v1682
    %v1895 = vpack.c.b16 %v1687, %v1683
    %v1896 = vpack.c.b16 %v1688, %v1684
    %v1897 = vpack.c.b16 %v1689, %v1685
    %v1898 = vpack.c.b16 %v1694, %v1690
    %v1899 = vpack.c.b16 %v1695, %v1691
    %v1900 = vpack.c.b16 %v1696, %v1692
    %v1901 = vpack.c.b16 %v1697, %v1693
    %v1902 = vpack.c.b16 %v1702, %v1698
    %v1903 = vpack.c.b16 %v1703, %v1699
    %v1904 = vpack.c.b16 %v1704, %v1700
    %v1905 = vpack.c.b16 %v1705, %v1701
    %v1906 = vpack.c.b16 %v1710, %v1706
    %v1907 = vpack.c.b16 %v1711, %v1707
    %v1908 = vpack.c.b16 %v1712, %v1708
    %v1909 = vpack.c.b16 %v1713, %v1709
    %v1910 = vpack.c.b16 %v1718, %v1714
    %v1911 = vpack.c.b16 %v1719, %v1715
    %v1912 = vpack.c.b16 %v1720, %v1716
    %v1913 = vpack.c.b16 %v1721, %v1717
    %v1914 = vpack.c.b16 %v1726, %v1722
    %v1915 = vpack.c.b16 %v1727, %v1723
    %v1916 = vpack.c.b16 %v1728, %v1724
    %v1917 = vpack.c.b16 %v1729, %v1725
    %v1918 = vpack.c.b16 %v1734, %v1730
    %v1919 = vpack.c.b16 %v1735, %v1731
    %v1920 = vpack.c.b16 %v1736, %v1732
    %v1921 = vpack.c.b16 %v1737, %v1733
    %v1922 = vpack.c.b16 %v1742, %v1738
    %v1923 = vpack.c.b16 %v1743, %v1739
    %v1924 = vpack.c.b16 %v1744, %v1740
    %v1925 = vpack.c.b16 %v1745, %v1741
    %v1926 = vpack.c.b16 %v1750, %v1746
    %v1927 = vpack.c.b16 %v1751, %v1747
    %v1928 = vpack.c.b16 %v1752, %v1748
    %v1929 = vpack.c.b16 %v1753, %v1749
    %v1930 = vpack.c.b16 %v1758, %v1754
    %v1931 = vpack.c.b16 %v1759, %v1755
    %v1932 = vpack.c.b16 %v1760, %v1756
    %v1933 = vpack.c.b16 %v1761, %v1757
    %v1934 = vpack.c.b16 %v1766, %v1762
    %v1935 = vpack.c.b16 %v1767, %v1763
    %v1936 = vpack.c.b16 %v1768, %v1764
    %v1937 = vpack.c.b16 %v1769, %v1765
    %v1938 = vpack.c.b16 %v1774, %v1770
    %v1939 = vpack.c.b16 %v1775, %v1771
    %v1940 = vpack.c.b16 %v1776, %v1772
    %v1941 = vpack.c.b16 %v1777, %v1773
    %v1942 = vpack.c.b16 %v1782, %v1778
    %v1943 = vpack.c.b16 %v1783, %v1779
    %v1944 = vpack.c.b16 %v1784, %v1780
    %v1945 = vpack.c.b16 %v1785, %v1781
    %v1946 = vpack.c.b16 %v1790, %v1786
    %v1947 = vpack.c.b16 %v1791, %v1787
    %v1948 = vpack.c.b16 %v1792, %v1788
    %v1949 = vpack.c.b16 %v1793, %v1789
    %v1950 = vpack.c.b16 %v1798, %v1794
    %v1951 = vpack.c.b16 %v1799, %v1795
    %v1952 = vpack.c.b16 %v1800, %v1796
    %v1953 = vpack.c.b16 %v1801, %v1797
    %v1954 = vpack.c.b16 %v1806, %v1802
    %v1955 = vpack.c.b16 %v1807, %v1803
    %v1956 = vpack.c.b16 %v1808, %v1804
    %v1957 = vpack.c.b16 %v1809, %v1805
    %v1958 = vpack.c.b16 %v1814, %v1810
    %v1959 = vpack.c.b16 %v1815, %v1811
    %v1960 = vpack.c.b16 %v1816, %v1812
    %v1961 = vpack.c.b16 %v1817, %v1813
    %v1962 = vpack.c.b16 %v1822, %v1818
    %v1963 = vpack.c.b16 %v1823, %v1819
    %v1964 = vpack.c.b16 %v1824, %v1820
    %v1965 = vpack.c.b16 %v1825, %v1821
    %v1966 = vpack.c.b16 %v1830, %v1826
    %v1967 = vpack.c.b16 %v1831, %v1827
    %v1968 = vpack.c.b16 %v1832, %v1828
    %v1969 = vpack.c.b16 %v1833, %v1829
    %v1970 = vpack.c.b16 %v1838, %v1834
    %v1971 = vpack.c.b16 %v1839, %v1835
    %v1972 = vpack.c.b16 %v1840, %v1836
    %v1973 = vpack.c.b16 %v1841, %v1837
    %v1974 = vpack.c.b16 %v1846, %v1842
    %v1975 = vpack.c.b16 %v1847, %v1843
    %v1976 = vpack.c.b16 %v1848, %v1844
    %v1977 = vpack.c.b16 %v1849, %v1845
    %2106 = vmatprep.subr.bf16.mxu0 %v1851
    %2107 = vmatpush1.bf16.msra.mxu0 %v1850
    %2108 = vmatprep.subr.bf16.mxu0 %v1855
    %2109 = vmatpush1.bf16.msra.mxu0 %v1854
    %2110 = vmatprep.subr.bf16.mxu0 %v1859
    %2111 = vmatpush1.bf16.msra.mxu0 %v1858
    %2112 = vmatprep.subr.bf16.mxu0 %v1863
    %2113 = vmatpush1.bf16.msra.mxu0 %v1862
    %2114 = vmatprep.subr.bf16.mxu0 %v1867
    %2115 = vmatpush1.bf16.msra.mxu0 %v1866
    %2116 = vmatprep.subr.bf16.mxu0 %v1871
    %2117 = vmatpush1.bf16.msra.mxu0 %v1870
    %2118 = vmatprep.subr.bf16.mxu0 %v1875
    %2119 = vmatpush1.bf16.msra.mxu0 %v1874
    %2120 = vmatprep.subr.bf16.mxu0 %v1879
    %2121 = vmatpush1.bf16.msra.mxu0 %v1878
    %2122 = vmatprep.subr.bf16.mxu0 %v1883
    %2123 = vmatpush1.bf16.msra.mxu0 %v1882
    %2124 = vmatprep.subr.bf16.mxu0 %v1887
    %2125 = vmatpush1.bf16.msra.mxu0 %v1886
    %2126 = vmatprep.subr.bf16.mxu0 %v1891
    %2127 = vmatpush1.bf16.msra.mxu0 %v1890
    %2128 = vmatprep.subr.bf16.mxu0 %v1895
    %2129 = vmatpush1.bf16.msra.mxu0 %v1894
    %2130 = vmatprep.subr.bf16.mxu0 %v1899
    %2131 = vmatpush1.bf16.msra.mxu0 %v1898
    %2132 = vmatprep.subr.bf16.mxu0 %v1903
    %2133 = vmatpush1.bf16.msra.mxu0 %v1902
    %2134 = vmatprep.subr.bf16.mxu0 %v1907
    %2135 = vmatpush1.bf16.msra.mxu0 %v1906
    %2136 = vmatprep.subr.bf16.mxu0 %v1911
    %2137 = vmatpush1.bf16.msra.mxu0 %v1910
    %2138 = vmatprep.mubr.bf16.mxu0 %v1313
    %2139 = vmatmul.mubr.bf16.gmra.mrb[0].mxu0 %v1312
    %v2140 = vpop.f32.mrb[0].mxu0
    %v2141 = vadd.f32 %v1449, %v2140
    %v2142 = vpop.f32.mrb[0].mxu0
    %v2143 = vadd.f32 %v1453, %v2142
    %v2144 = vpop.f32.mrb[0].mxu0
    %v2145 = vpop.f32.mrb[0].mxu0
    %2146 = vdwg.mxu0
    %2147 = vmatprep.subr.bf16.mxu0 %v1915
    %2148 = vmatpush1.bf16.msra.mxu0 %v1914
    %2149 = vmatprep.subr.bf16.mxu0 %v1919
    %2150 = vmatpush1.bf16.msra.mxu0 %v1918
    %2151 = vmatprep.subr.bf16.mxu0 %v1923
    %2152 = vmatpush1.bf16.msra.mxu0 %v1922
    %2153 = vmatprep.subr.bf16.mxu0 %v1927
    %2154 = vmatpush1.bf16.msra.mxu0 %v1926
    %2155 = vmatprep.subr.bf16.mxu0 %v1931
    %2156 = vmatpush1.bf16.msra.mxu0 %v1930
    %2157 = vmatprep.subr.bf16.mxu0 %v1935
    %2158 = vmatpush1.bf16.msra.mxu0 %v1934
    %2159 = vmatprep.subr.bf16.mxu0 %v1939
    %2160 = vmatpush1.bf16.msra.mxu0 %v1938
    %2161 = vmatprep.subr.bf16.mxu0 %v1943
    %2162 = vmatpush1.bf16.msra.mxu0 %v1942
    %2163 = vmatprep.subr.bf16.mxu0 %v1947
    %2164 = vmatpush1.bf16.msra.mxu0 %v1946
    %2165 = vmatprep.subr.bf16.mxu0 %v1951
    %2166 = vmatpush1.bf16.msra.mxu0 %v1950
    %2167 = vmatprep.subr.bf16.mxu0 %v1955
    %2168 = vmatpush1.bf16.msra.mxu0 %v1954
    %2169 = vmatprep.subr.bf16.mxu0 %v1959
    %2170 = vmatpush1.bf16.msra.mxu0 %v1958
    %2171 = vmatprep.subr.bf16.mxu0 %v1963
    %2172 = vmatpush1.bf16.msra.mxu0 %v1962
    %2173 = vmatprep.subr.bf16.mxu0 %v1967
    %2174 = vmatpush1.bf16.msra.mxu0 %v1966
    %2175 = vmatprep.subr.bf16.mxu0 %v1971
    %2176 = vmatpush1.bf16.msra.mxu0 %v1970
    %2177 = vmatprep.subr.bf16.mxu0 %v1975
    %2178 = vmatpush1.bf16.msra.mxu0 %v1974
    %2179 = vmatprep.mubr.bf16.mxu0 %v1315
    %2180 = vmatmul.mubr.bf16.gmra.mrb[0].mxu0 %v1314
    %v2181 = vpop.f32.mrb[0].mxu0
    %v2182 = vadd.f32 %v2141, %v2181
    %v2183 = vpop.f32.mrb[0].mxu0
    %v2184 = vadd.f32 %v2143, %v2183
    %v2185 = vpop.f32.mrb[0].mxu0
    %v2186 = vpop.f32.mrb[0].mxu0
    %2187 = vdwg.mxu0
    %2188 = vmatprep.subr.bf16.mxu0 %v1853
    %2189 = vmatpush1.bf16.msra.mxu0 %v1852
    %2190 = vmatprep.subr.bf16.mxu0 %v1857
    %2191 = vmatpush1.bf16.msra.mxu0 %v1856
    %2192 = vmatprep.subr.bf16.mxu0 %v1861
    %2193 = vmatpush1.bf16.msra.mxu0 %v1860
    %2194 = vmatprep.subr.bf16.mxu0 %v1865
    %2195 = vmatpush1.bf16.msra.mxu0 %v1864
    %2196 = vmatprep.subr.bf16.mxu0 %v1869
    %2197 = vmatpush1.bf16.msra.mxu0 %v1868
    %2198 = vmatprep.subr.bf16.mxu0 %v1873
    %2199 = vmatpush1.bf16.msra.mxu0 %v1872
    %2200 = vmatprep.subr.bf16.mxu0 %v1877
    %2201 = vmatpush1.bf16.msra.mxu0 %v1876
    %2202 = vmatprep.subr.bf16.mxu0 %v1881
    %2203 = vmatpush1.bf16.msra.mxu0 %v1880
    %2204 = vmatprep.subr.bf16.mxu0 %v1885
    %2205 = vmatpush1.bf16.msra.mxu0 %v1884
    %2206 = vmatprep.subr.bf16.mxu0 %v1889
    %2207 = vmatpush1.bf16.msra.mxu0 %v1888
    %2208 = vmatprep.subr.bf16.mxu0 %v1893
    %2209 = vmatpush1.bf16.msra.mxu0 %v1892
    %2210 = vmatprep.subr.bf16.mxu0 %v1897
    %2211 = vmatpush1.bf16.msra.mxu0 %v1896
    %2212 = vmatprep.subr.bf16.mxu0 %v1901
    %2213 = vmatpush1.bf16.msra.mxu0 %v1900
    %2214 = vmatprep.subr.bf16.mxu0 %v1905
    %2215 = vmatpush1.bf16.msra.mxu0 %v1904
    %2216 = vmatprep.subr.bf16.mxu0 %v1909
    %2217 = vmatpush1.bf16.msra.mxu0 %v1908
    %2218 = vmatprep.subr.bf16.mxu0 %v1913
    %2219 = vmatpush1.bf16.msra.mxu0 %v1912
    %2220 = vmatprep.mubr.bf16.mxu0 %v1313
    %2221 = vmatmul.mubr.bf16.gmra.mrb[0].mxu0 %v1312
    %v2222 = vpop.f32.mrb[0].mxu0
    %v2223 = vadd.f32 %v1457, %v2222
    %v2224 = vpop.f32.mrb[0].mxu0
    %v2225 = vadd.f32 %v1461, %v2224
    %v2226 = vpop.f32.mrb[0].mxu0
    %v2227 = vpop.f32.mrb[0].mxu0
    %2228 = vdwg.mxu0
    %2229 = vmatprep.subr.bf16.mxu0 %v1917
    %2230 = vmatpush1.bf16.msra.mxu0 %v1916
    %2231 = vmatprep.subr.bf16.mxu0 %v1921
    %2232 = vmatpush1.bf16.msra.mxu0 %v1920
    %2233 = vmatprep.subr.bf16.mxu0 %v1925
    %2234 = vmatpush1.bf16.msra.mxu0 %v1924
    %2235 = vmatprep.subr.bf16.mxu0 %v1929
    %2236 = vmatpush1.bf16.msra.mxu0 %v1928
    %2237 = vmatprep.subr.bf16.mxu0 %v1933
    %2238 = vmatpush1.bf16.msra.mxu0 %v1932
    %2239 = vmatprep.subr.bf16.mxu0 %v1937
    %2240 = vmatpush1.bf16.msra.mxu0 %v1936
    %2241 = vmatprep.subr.bf16.mxu0 %v1941
    %2242 = vmatpush1.bf16.msra.mxu0 %v1940
    %2243 = vmatprep.subr.bf16.mxu0 %v1945
    %2244 = vmatpush1.bf16.msra.mxu0 %v1944
    %2245 = vmatprep.subr.bf16.mxu0 %v1949
    %2246 = vmatpush1.bf16.msra.mxu0 %v1948
    %2247 = vmatprep.subr.bf16.mxu0 %v1953
    %2248 = vmatpush1.bf16.msra.mxu0 %v1952
    %2249 = vmatprep.subr.bf16.mxu0 %v1957
    %2250 = vmatpush1.bf16.msra.mxu0 %v1956
    %2251 = vmatprep.subr.bf16.mxu0 %v1961
    %2252 = vmatpush1.bf16.msra.mxu0 %v1960
    %2253 = vmatprep.subr.bf16.mxu0 %v1965
    %2254 = vmatpush1.bf16.msra.mxu0 %v1964
    %2255 = vmatprep.subr.bf16.mxu0 %v1969
    %2256 = vmatpush1.bf16.msra.mxu0 %v1968
    %2257 = vmatprep.subr.bf16.mxu0 %v1973
    %2258 = vmatpush1.bf16.msra.mxu0 %v1972
    %2259 = vmatprep.subr.bf16.mxu0 %v1977
    %2260 = vmatpush1.bf16.msra.mxu0 %v1976
    %2261 = vmatprep.mubr.bf16.mxu0 %v1315
    %2262 = vmatmul.mubr.bf16.gmra.mrb[0].mxu0 %v1314
    %v2263 = vpop.f32.mrb[0].mxu0
    %v2264 = vadd.f32 %v2223, %v2263
    %v2265 = vpop.f32.mrb[0].mxu0
    %v2266 = vadd.f32 %v2225, %v2265
    %v2267 = vpop.f32.mrb[0].mxu0
    %v2268 = vpop.f32.mrb[0].mxu0
    %2269 = vdwg.mxu0
    %v2270 = vmax.f32 %v2182, 0.0
    %v2271 = vmax.f32 %v2184, 0.0
    %v2272 = vmax.f32 %v2264, 0.0
    %v2273 = vmax.f32 %v2266, 0.0
    %v2274 = vld [vmem:[%s9] sm:$0xf]
    %v2276 = vlaneseq
    %v2277 = vshrl.u32 %v2276, 7
    %v2278 = vsub.s32 0, %v2277
    %v2279 = vrot.slane %v2274, %v2278
    %v2280 = vlaneseq
    %v2281 = vshrl.u32 %v2280, 7
    %v2282 = vsub.s32 1, %v2281
    %v2283 = vrot.slane %v2274, %v2282
    %v2284 = vlaneseq
    %v2285 = vshrl.u32 %v2284, 7
    %v2286 = vsub.s32 2, %v2285
    %v2287 = vrot.slane %v2274, %v2286
    %v2288 = vlaneseq
    %v2289 = vshrl.u32 %v2288, 7
    %v2290 = vsub.s32 3, %v2289
    %v2291 = vrot.slane %v2274, %v2290
    %v2296 = vmul.f32 %v2270, %v2279
    %v2297 = vmul.f32 %v2271, %v2283
    %v2298 = vmul.f32 %v2272, %v2287
    %v2299 = vmul.f32 %v2273, %v2291
    %v2300 = vadd.f32 %v2296, %v2297
    %v2301 = vadd.f32 %v2300, %v2298
    %v2302 = vadd.f32 %v2301, %v2299
    %2303 = vadd.xlane.f32.xlu0 %v2302
    %v2304 = vpop.xlane.xlu0 %2303
    %v2305 = vld [vmem:[#allocation2] sm:$0x1]
    %v2307 = vlaneseq
    %v2308 = vshrl.u32 %v2307, 7
    %v2309 = vsub.s32 0, %v2308
    %v2310 = vrot.slane %v2305, %v2309
    %v2312 = vadd.f32 %v2304, %v2310
    %v2313 = vxor.u32 %v2312, 2147483648
    %v2314 = vmul.f32 %v2313, 1.442695
    %v2315 = vpow.pop %v2314
    %v2316 = vadd.f32 %v2315, 1.0
    %v2317 = vrcp.pop %v2316
    %v2318 = vmul.f32 1.0, %v2317
    %v2319 = vmul.f32 %v2318, 0.5
    %vm2320 = vcmask 7168
    %2321 = vst.msk [vmem:[%s11] sm:$0xff] %vm2320, %v2319
    // Predicated region
    $region58: #{tpu_custom_call.1} parent=1 // pred_check
      _
    $region59: #{tpu_custom_call.1} parent=1 // pred_check_branch
      %2323 = sbr.rel (0) target = $region61
    $region60: #{tpu_custom_call.1} parent=1 // pred_region
      _
    $region61: #{tpu_custom_call.1} parent=1 // pred_fallthru
      _
    // Predicated region
    $region62: #{tpu_custom_call.1} parent=1 // pred_check
      _
    $region63: #{tpu_custom_call.1} parent=1 // pred_check_branch
      %2325 = sbr.rel (0) target = $region65
    $region64: #{tpu_custom_call.1} parent=1 // pred_region
      _
    $region65: #{tpu_custom_call.1} parent=1 // pred_fallthru
      _
    %2326 = vsyncpa [#allocation4], 1
    %2327 = vsyncpa [#allocation6], 1

</llo_original>
